<compile_context>
chip_gen: v7x
topology: tpu7x:2x2x1
jax: 0.10.0
libtpu: 0.0.40
codegen_flags: <defaults>
</compile_context>

<pallas_src>
import functools
import math

import jax
import jax.numpy as jnp
from jax.experimental import pallas as pl
from jax.experimental.pallas import tpu as pltpu

_MIB = 1024 * 1024
_NEG_BIG = -1.0e30      # finite "-inf" sentinel (avoids inf arithmetic in the carries)
_POS_BIG = 3.0e38       # finite "+inf" sentinel for masked min/max


def _softplus(x):
    # numerically stable softplus that lowers cleanly on Mosaic
    return jnp.maximum(x, 0.0) + jnp.log(1.0 + jnp.exp(-jnp.abs(x)))


def _round_up(x, m):
    return (x + m - 1) // m * m


def _pad2(a, rows, cols):
    return jnp.pad(a, ((0, rows - a.shape[0]), (0, cols - a.shape[1])))


def _resident_spec(shape):
    """BlockSpec for a weight whose block never changes: constant index map and
    single-buffered pipelining (no wasted second VMEM copy). Falls back if the
    installed Pallas does not accept pipeline_mode."""
    idx = lambda *_: (0,) * len(shape)
    try:
        return pl.BlockSpec(shape, idx, pipeline_mode=pl.Buffered(1))
    except (AttributeError, TypeError):
        return pl.BlockSpec(shape, idx)


def _tpu_caps():
    """(scoped-VMEM bytes we are willing to request, max pass-2 row tile)."""
    try:
        vmem_phys = int(pltpu.get_tpu_info().vmem_capacity_bytes)
    except Exception:                       # query unavailable -> assume smallest VMEM
        vmem_phys = 64 * _MIB
    if vmem_phys >= 128 * _MIB:             # v5e / v6e: 128 MiB physical
        return 100 * _MIB, 1024
    return 48 * _MIB, 512                   # v7x: 64 MiB physical; leave headroom


def _pick_time_chunk(t, max_chunk=256):
    """Largest multiple-of-8 divisor of T that is <= max_chunk; fall back to T itself
    (a block dim equal to the full axis is always legal)."""
    d = min(max_chunk, t)
    d -= d % 8
    while d >= 8:
        if t % d == 0:
            return d
        d -= 8
    return t


# ---------------------------------------------------------------------------
# Pass 1: LayerNorm + minGRU (Heinsen log-space scan), chunked along time with
# running carries; grid = (batch, time-chunk).  Also accumulates a per-batch
# (min, max) tile of the minGRU output for the global stretch of pass 2.
# ---------------------------------------------------------------------------
def _gru_scan_kernel(x_ref, gamma_ref, beta_ref, w_hg_ref,
                     gru_ref, stats_ref,
                     a_carry, m_carry, l_carry, *, eps, hidden):
    c = pl.program_id(1)                    # time-chunk index (innermost, "arbitrary")
    Tc, Hp = x_ref.shape
    need_mask = hidden != Hp                # static (trace-time) Python bool

    @pl.when(c == 0)
    def _():                                # reset running carries per batch
        a_carry[...] = jnp.zeros_like(a_carry)
        m_carry[...] = jnp.full_like(m_carry, _NEG_BIG)
        l_carry[...] = jnp.zeros_like(l_carry)

    x = x_ref[...]                          # (Tc, Hp), padded lanes are exactly zero

    # ---- LayerNorm over the REAL hidden features only (eps=1e-5, affine) ----
    if need_mask:
        lane = jax.lax.broadcasted_iota(jnp.int32, (Tc, Hp), 1)
        lane_mask = lane < hidden
    inv_h = 1.0 / hidden
    mean = jnp.sum(x, axis=-1, keepdims=True) * inv_h      # padded lanes contribute 0
    xc = x - mean
    if need_mask:
        xc = jnp.where(lane_mask, xc, 0.0)
    var = jnp.sum(xc * xc, axis=-1, keepdims=True) * inv_h
    xn = xc * jax.lax.rsqrt(var + eps)
    xn = xn * gamma_ref[...] + beta_ref[...]                # padded gamma/beta are 0

    # ---- fused to_hidden_and_gate: one (Hp, 2Hp) bf16 matmul, f32 accumulate ----
    hg = jnp.dot(xn.astype(jnp.bfloat16), w_hg_ref[...],
                 preferred_element_type=jnp.float32)        # (Tc, 2*Hp)
    hidden_pre = hg[:, :Hp]
    gate = hg[:, Hp:]

    # softplus(gate) computed once; identity: -softplus(-g) = g - softplus(g)
    sp_gate = _softplus(gate)
    log_coeffs = -sp_gate                                   # log(1 - z)
    log_z = gate - sp_gate                                  # log(z)
    log_tilde_h = jnp.where(hidden_pre >= 0.0,
                            jnp.log(jnp.maximum(hidden_pre, 0.0) + 0.5),
                            -_softplus(-hidden_pre))
    log_values = log_z + log_tilde_h

    # ---- blockwise Heinsen scan (f32 tril matmuls, running-max stabilization) ----
    row = jax.lax.broadcasted_iota(jnp.int32, (Tc, Tc), 0)
    col = jax.lax.broadcasted_iota(jnp.int32, (Tc, Tc), 1)
    tril = (col <= row).astype(jnp.float32)                 # inclusive lower-triangular

    a_loc = jnp.dot(tril, log_coeffs, preferred_element_type=jnp.float32)
    a_star = a_carry[...] + a_loc                           # includes previous chunks
    y = log_values - a_star
    m_new = jnp.maximum(m_carry[...], jnp.max(y, axis=0, keepdims=True))   # (1, Hp)
    p = jnp.exp(y - m_new)
    cse = jnp.dot(tril, p, preferred_element_type=jnp.float32)
    cse = cse + jnp.exp(m_carry[...] - m_new) * l_carry[...]
    log_h = a_star + m_new + jnp.log(jnp.maximum(cse, 1e-37))   # clamp: no -inf/NaN
    out = jnp.exp(log_h)                                    # minGRU output chunk

    gru_ref[...] = out

    # ---- update carries for the next chunk ----
    a_carry[...] = a_star[Tc - 1:Tc, :]
    l_carry[...] = cse[Tc - 1:Tc, :]
    m_carry[...] = m_new

    # ---- per-batch running (min, max) over the REAL lanes, one merged (2,128) tile ----
    if need_mask:
        omin = jnp.min(jnp.where(lane_mask, out, _POS_BIG))
        omax = jnp.max(jnp.where(lane_mask, out, -_POS_BIG))
    else:
        omin = jnp.min(out)
        omax = jnp.max(out)
    rowsel = jax.lax.broadcasted_iota(jnp.int32, (2, 128), 0)
    cur = jnp.where(rowsel == 0, omin, omax)                # row0 = min, row1 = max

    @pl.when(c == 0)
    def _():
        stats_ref[...] = cur

    @pl.when(c > 0)
    def _():
        prev = stats_ref[...]
        stats_ref[...] = jnp.where(rowsel == 0,
                                   jnp.minimum(prev, cur),
                                   jnp.maximum(prev, cur))


# ---------------------------------------------------------------------------
# Pass 2: stretch (with global min/max scalars) + PraxisMLP + residual,
# row-tiled over the flattened, padded (BTp, Hp) slab (lane-dense stores).
# ---------------------------------------------------------------------------
def _stretch_mlp_kernel(stats_ref, gru_ref, x_ref,
                        w_up_ref, b_up_ref, w_dn_ref, b_dn_ref, o_ref):
    gmin = stats_ref[0]                                     # global min (SMEM scalar)
    gmax = stats_ref[1]                                     # global max (SMEM scalar)
    out = gru_ref[...]                                      # (tile, Hp) minGRU output
    x = x_ref[...]                                          # (tile, Hp) original inputs

    # ---- stretch(out, target_min=-1.0) ----
    rng = jnp.full((1, 1), gmax - gmin, jnp.float32)
    rng = jnp.where(rng > 0.0, rng, 1.0)        # deliberate guard: reference would NaN
    inv = pl.reciprocal(rng, approx=False)      # exact; one scalar per tile
    progress = (out - gmin) * inv
    stretched = -1.0 + progress * (gmax + 1.0)  # target_min + progress*(max - target_min)

    # ---- PraxisMLP: Linear(H, 4H) -> GELU -> Linear(4H, H); bf16 MXU, f32 accum ----
    up = jnp.dot(stretched.astype(jnp.bfloat16), w_up_ref[...],
                 preferred_element_type=jnp.float32) + b_up_ref[...]
    act = 0.5 * up * (1.0 + jnp.tanh(0.7978845608028654 * (up + 0.044715 * up * up * up)))
    dn = jnp.dot(act.astype(jnp.bfloat16), w_dn_ref[...],
                 preferred_element_type=jnp.float32) + b_dn_ref[...]

    # ---- residual with the ORIGINAL (un-normalized) inputs ----
    o_ref[...] = dn + x


# ---------------------------------------------------------------------------
# Host-side wrapper
# ---------------------------------------------------------------------------
def init_params(key, hidden_size):
    H = hidden_size
    k1, k2, k3, k4, k5 = jax.random.split(key, 5)

    def linear_w(k, out_f, in_f):
        bound = 1.0 / math.sqrt(in_f)
        return jax.random.uniform(k, (out_f, in_f), jnp.float32, -bound, bound)

    def linear_b(k, out_f, in_f):
        bound = 1.0 / math.sqrt(in_f)
        return jax.random.uniform(k, (1, out_f), jnp.float32, -bound, bound)

    # minGRU to_hidden_and_gate: Linear(H, 2H, bias=False); rows [:H]=hidden, [H:]=gate
    w_hg = linear_w(k1, 2 * H, H)                           # torch layout (2H, H)
    return {
        "ln_gamma": jnp.ones((1, H), jnp.float32),
        "ln_beta": jnp.zeros((1, H), jnp.float32),
        "w_hg": jnp.transpose(w_hg),                        # (H, 2H), fused hidden|gate
        "w_up": jnp.transpose(linear_w(k2, 4 * H, H)),      # (H, 4H)
        "b_up": linear_b(k3, 4 * H, H),                     # (1, 4H)
        "w_dn": jnp.transpose(linear_w(k4, H, 4 * H)),      # (4H, H)
        "b_dn": linear_b(k5, H, 4 * H),                     # (1, H)
    }


@jax.jit
def _forward_impl(inputs, params):
    B, T, H = inputs.shape
    Hp = _round_up(H, 128)                                  # lane-dense feature dim
    F = 4 * H
    Fp = _round_up(F, 128)                                  # lane-dense MLP inner dim
    cap, max_tile = _tpu_caps()

    x = inputs.astype(jnp.float32)
    xp = jnp.pad(x, ((0, 0), (0, 0), (0, Hp - H)))          # (B, T, Hp), zero padded

    gamma = _pad2(params["ln_gamma"], 1, Hp)
    beta = _pad2(params["ln_beta"], 1, Hp)
    w_hg = params["w_hg"]                                   # (H, 2H) = [hidden | gate]
    w_hgp = jnp.concatenate([_pad2(w_hg[:, :H], Hp, Hp),
                             _pad2(w_hg[:, H:], Hp, Hp)],
                            axis=1).astype(jnp.bfloat16)    # (Hp, 2Hp) bf16
    w_up = _pad2(params["w_up"], Hp, Fp).astype(jnp.bfloat16)
    b_up = _pad2(params["b_up"], 1, Fp)
    w_dn = _pad2(params["w_dn"], Fp, Hp).astype(jnp.bfloat16)
    b_dn = _pad2(params["b_dn"], 1, Hp)

    # ---- pass 1: LayerNorm + chunked minGRU scan (batch parallel, time arbitrary) ----
    Tc = _pick_time_chunk(T)
    NC = T // Tc
    p1_est = (4 * 2 * (2 * Tc * Hp)                         # x + gru tiles, double-buffered
              + 2 * (2 * Hp * Hp)                           # bf16 fused (Hp, 2Hp) weight
              + 4 * (Tc * 2 * Hp + 10 * Tc * Hp + Tc * Tc + 6 * Hp + 2 * 128))
    limit1 = int(min(cap, max(32 * _MIB, 2 * p1_est)))

    kernel1 = functools.partial(_gru_scan_kernel, eps=1e-5, hidden=H)
    gru_out, stats = pl.pallas_call(
        kernel1,
        grid=(B, NC),
        in_specs=[
            pl.BlockSpec((None, Tc, Hp), lambda b, c: (b, c, 0)),  # x chunk
            _resident_spec((1, Hp)),                               # ln gamma
            _resident_spec((1, Hp)),                               # ln beta
            _resident_spec((Hp, 2 * Hp)),                          # fused w_hg (bf16)
        ],
        out_specs=[
            pl.BlockSpec((None, Tc, Hp), lambda b, c: (b, c, 0)),  # minGRU output chunk
            pl.BlockSpec((None, 2, 128), lambda b, c: (b, 0, 0)),  # per-batch [min; max]
        ],
        out_shape=[
            jax.ShapeDtypeStruct((B, T, Hp), jnp.float32),
            jax.ShapeDtypeStruct((B, 2, 128), jnp.float32),
        ],
        scratch_shapes=[pltpu.VMEM((1, Hp), jnp.float32),          # a_star carry
                        pltpu.VMEM((1, Hp), jnp.float32),          # running max m
                        pltpu.VMEM((1, Hp), jnp.float32)],         # running cum-sum-exp
        compiler_params=pltpu.CompilerParams(
            dimension_semantics=("parallel", "arbitrary"),
            vmem_limit_bytes=limit1),
    )(xp, gamma, beta, w_hgp)

    # tiny cross-batch reduction for stretch's global min/max
    gmin = jnp.min(stats[:, 0, 0])
    gmax = jnp.max(stats[:, 1, 0])
    stats_vec = jnp.stack([gmin, gmax]).astype(jnp.float32)        # (2,) SMEM scalars

    # ---- pass 2: stretch + MLP + residual (row-tiled, lane-dense, megacore-parallel) ----
    BT = B * T

    def p2_bytes(tile):
        return (4 * 2 * (3 * tile * Hp)                    # gru/x/out tiles, 2 buffers
                + 2 * (2 * Hp * Fp)                        # bf16 w_up + w_dn
                + 4 * (Fp + Hp)                            # biases
                + 4 * (2 * tile * Fp + 2 * tile * Hp))     # up/act + elementwise temps

    btp = _round_up(BT, 8)
    if btp >= 2 * max_tile:
        tbt = max_tile
    elif btp > 8:
        tbt = _round_up((btp + 1) // 2, 8)                 # always >= 2 grid steps
    else:
        tbt = btp
    while tbt > 8 and p2_bytes(tbt) > int(0.75 * cap):     # shrink until it fits VMEM
        tbt = max(8, ((tbt // 2) // 8) * 8)
    BTp = _round_up(btp, tbt)
    limit2 = int(min(cap, max(32 * _MIB, 2 * p2_bytes(tbt))))

    gru2 = gru_out.reshape(BT, Hp)
    x2 = xp.reshape(BT, Hp)
    if BTp != BT:                                          # pad rows; sliced away below
        gru2 = jnp.pad(gru2, ((0, BTp - BT), (0, 0)))
        x2 = jnp.pad(x2, ((0, BTp - BT), (0, 0)))

    out2 = pl.pallas_call(
        _stretch_mlp_kernel,
        grid=(BTp // tbt,),
        in_specs=[
            pl.BlockSpec(memory_space=pltpu.MemorySpace.SMEM),     # [gmin, gmax]
            pl.BlockSpec((tbt, Hp), lambda i: (i, 0)),             # minGRU output tile
            pl.BlockSpec((tbt, Hp), lambda i: (i, 0)),             # original inputs tile
            _resident_spec((Hp, Fp)),                              # w_up (bf16)
            _resident_spec((1, Fp)),                               # b_up
            _resident_spec((Fp, Hp)),                              # w_dn (bf16)
            _resident_spec((1, Hp)),                               # b_dn
        ],
        out_specs=pl.BlockSpec((tbt, Hp), lambda i: (i, 0)),
        out_shape=jax.ShapeDtypeStruct((BTp, Hp), jnp.float32),
        compiler_params=pltpu.CompilerParams(
            dimension_semantics=("parallel",),
            vmem_limit_bytes=limit2),
    )(stats_vec, gru2, x2, w_up, b_up, w_dn, b_dn)

    return out2[:BT, :H].reshape(B, T, H)


def praxis_gru_forward(inputs, params):
    """inputs: (B, T, H) float32. Returns (out, None, None, 0) like the module."""
    return (_forward_impl(inputs, params), None, None, 0)


if __name__ == "__main__":
    B, T, H = 2, 8, 32
    key = jax.random.PRNGKey(0)
    k_x, k_p = jax.random.split(key)
    x = jax.random.normal(k_x, (B, T, H), dtype=jnp.float32)
    params = init_params(k_p, H)

    out, _, _, _ = praxis_gru_forward(x, params)
    out = jax.block_until_ready(out)
    assert out.shape == (B, T, H)
    assert bool(jnp.all(jnp.isfinite(out)))
    print("KERNEL_OK")
</pallas_src>

<mosaic_0001>
module attributes {stable_mosaic.version = 11 : i64} {
  func.func @_gru_scan_kernel(%arg0: i32, %arg1: i32, %arg2: memref<1x8x128xf32, #tpu.memory_space<vmem>>, %arg3: memref<1x128xf32, #tpu.memory_space<vmem>>, %arg4: memref<1x128xf32, #tpu.memory_space<vmem>>, %arg5: memref<128x256xbf16, #tpu.memory_space<vmem>>, %arg6: memref<1x8x128xf32, #tpu.memory_space<vmem>>, %arg7: memref<1x2x128xf32, #tpu.memory_space<vmem>>, %arg8: memref<1x128xf32, #tpu.memory_space<vmem>>, %arg9: memref<1x128xf32, #tpu.memory_space<vmem>>, %arg10: memref<1x128xf32, #tpu.memory_space<vmem>>) attributes {dimension_semantics = [#tpu.dimension_semantics<parallel>, #tpu.dimension_semantics<arbitrary>], iteration_bounds = array<i64: 2, 1>, scalar_prefetch = 0 : i64, scratch_operands = 3 : i64, tpu.core_type = #tpu.core_type<tc>, window_params = [{transform_indices = @transform_0, window_bounds = array<i64: 1, 8, 128>}, {pipeline_mode = #tpu.pipeline_mode<synchronous>, transform_indices = @transform_1, window_bounds = array<i64: 1, 128>}, {pipeline_mode = #tpu.pipeline_mode<synchronous>, transform_indices = @transform_2, window_bounds = array<i64: 1, 128>}, {pipeline_mode = #tpu.pipeline_mode<synchronous>, transform_indices = @transform_3, window_bounds = array<i64: 128, 256>}, {transform_indices = @transform_4, window_bounds = array<i64: 1, 8, 128>}, {transform_indices = @transform_5, window_bounds = array<i64: 1, 2, 128>}]} {
    %c0_i32 = arith.constant 0 : i32
    %0 = arith.cmpi eq, %arg1, %c0_i32 : i32
    %1 = arith.extui %0 : i1 to i32
    %c0_i32_0 = arith.constant 0 : i32
    %2 = arith.cmpi ne, %1, %c0_i32_0 : i32
    scf.if %2 {
      %cst_57 = arith.constant 0.000000e+00 : f32
      %137 = vector.broadcast %cst_57 : f32 to vector<1x128xf32>
      %c0_58 = arith.constant 0 : index
      %c0_59 = arith.constant 0 : index
      %138 = vector.load %arg8[%c0_58, %c0_59] : memref<1x128xf32, #tpu.memory_space<vmem>>, vector<1x128xf32>
      tpu.vector_store %arg8[%c0_58, %c0_59], %137 {strides = array<i32>} : memref<1x128xf32, #tpu.memory_space<vmem>>, vector<1x128xf32>,
      %cst_60 = arith.constant -1.000000e+30 : f32
      %139 = vector.broadcast %cst_60 : f32 to vector<1x128xf32>
      %c0_61 = arith.constant 0 : index
      %c0_62 = arith.constant 0 : index
      %140 = vector.load %arg9[%c0_61, %c0_62] : memref<1x128xf32, #tpu.memory_space<vmem>>, vector<1x128xf32>
      tpu.vector_store %arg9[%c0_61, %c0_62], %139 {strides = array<i32>} : memref<1x128xf32, #tpu.memory_space<vmem>>, vector<1x128xf32>,
      %cst_63 = arith.constant 0.000000e+00 : f32
      %141 = vector.broadcast %cst_63 : f32 to vector<1x128xf32>
      %c0_64 = arith.constant 0 : index
      %c0_65 = arith.constant 0 : index
      %142 = vector.load %arg10[%c0_64, %c0_65] : memref<1x128xf32, #tpu.memory_space<vmem>>, vector<1x128xf32>
      tpu.vector_store %arg10[%c0_64, %c0_65], %141 {strides = array<i32>} : memref<1x128xf32, #tpu.memory_space<vmem>>, vector<1x128xf32>,
    } else {
    }
    %c0 = arith.constant 0 : index
    %c0_1 = arith.constant 0 : index
    %c0_2 = arith.constant 0 : index
    %3 = vector.load %arg2[%c0, %c0_1, %c0_2] : memref<1x8x128xf32, #tpu.memory_space<vmem>>, vector<1x8x128xf32>
    %4 = vector.shape_cast %3 : vector<1x8x128xf32> to vector<8x128xf32>
    %5 = tpu.iota {dimensions = array<i32: 1>} : vector<8x128xi32>
    %c32_i32 = arith.constant 32 : i32
    %6 = vector.broadcast %c32_i32 : i32 to vector<8x128xi32>
    %7 = arith.cmpi slt, %5, %6 : vector<8x128xi32>
    %cst = arith.constant dense<0.000000e+00> : vector<8xf32>
    %8 = vector.multi_reduction <add>, %4, %cst [1] : vector<8x128xf32> to vector<8xf32>
    %9 = vector.shape_cast %8 : vector<8xf32> to vector<8x1xf32>
    %cst_3 = arith.constant 3.125000e-02 : f32
    %10 = vector.broadcast %cst_3 : f32 to vector<8x1xf32>
    %11 = arith.mulf %9, %10 : vector<8x1xf32>
    %12 = vector.broadcast %11 : vector<8x1xf32> to vector<8x128xf32>
    %13 = arith.subf %4, %12 : vector<8x128xf32>
    %cst_4 = arith.constant 0.000000e+00 : f32
    %14 = vector.broadcast %cst_4 : f32 to vector<8x128xf32>
    %15 = arith.select %7, %13, %14 : vector<8x128xi1>, vector<8x128xf32>
    %16 = arith.mulf %15, %15 : vector<8x128xf32>
    %cst_5 = arith.constant dense<0.000000e+00> : vector<8xf32>
    %17 = vector.multi_reduction <add>, %16, %cst_5 [1] : vector<8x128xf32> to vector<8xf32>
    %18 = vector.shape_cast %17 : vector<8xf32> to vector<8x1xf32>
    %cst_6 = arith.constant 3.125000e-02 : f32
    %19 = vector.broadcast %cst_6 : f32 to vector<8x1xf32>
    %20 = arith.mulf %18, %19 : vector<8x1xf32>
    %cst_7 = arith.constant 9.99999974E-6 : f32
    %21 = vector.broadcast %cst_7 : f32 to vector<8x1xf32>
    %22 = arith.addf %20, %21 : vector<8x1xf32>
    %23 = math.rsqrt %22 : vector<8x1xf32>
    %24 = vector.broadcast %23 : vector<8x1xf32> to vector<8x128xf32>
    %25 = arith.mulf %15, %24 : vector<8x128xf32>
    %c0_8 = arith.constant 0 : index
    %c0_9 = arith.constant 0 : index
    %26 = vector.load %arg3[%c0_8, %c0_9] : memref<1x128xf32, #tpu.memory_space<vmem>>, vector<1x128xf32>
    %27 = vector.broadcast %26 : vector<1x128xf32> to vector<8x128xf32>
    %28 = arith.mulf %25, %27 : vector<8x128xf32>
    %c0_10 = arith.constant 0 : index
    %c0_11 = arith.constant 0 : index
    %29 = vector.load %arg4[%c0_10, %c0_11] : memref<1x128xf32, #tpu.memory_space<vmem>>, vector<1x128xf32>
    %30 = vector.broadcast %29 : vector<1x128xf32> to vector<8x128xf32>
    %31 = arith.addf %28, %30 : vector<8x128xf32>
    %32 = arith.truncf %31 : vector<8x128xf32> to vector<8x128xbf16>
    %c0_12 = arith.constant 0 : index
    %c0_13 = arith.constant 0 : index
    %33 = vector.load %arg5[%c0_12, %c0_13] : memref<128x256xbf16, #tpu.memory_space<vmem>>, vector<128x256xbf16>
    %cst_14 = arith.constant dense<0.000000e+00> : vector<8x256xf32>
    %34 = tpu.matmul %32, %33, %cst_14 {dimension_numbers = #tpu.dot_dimension_numbers<[1], [0], [0], [1], [0, 0, 1, 1], [], []>} : vector<8x128xbf16>, vector<128x256xbf16>, vector<8x256xf32> -> vector<8x256xf32>
    %35 = vector.extract_strided_slice %34 {offsets = [0, 0], sizes = [8, 128], strides = [1, 1]} : vector<8x256xf32> to vector<8x128xf32>
    %36 = vector.extract_strided_slice %34 {offsets = [0, 128], sizes = [8, 128], strides = [1, 1]} : vector<8x256xf32> to vector<8x128xf32>
    %cst_15 = arith.constant 0.000000e+00 : f32
    %37 = vector.broadcast %cst_15 : f32 to vector<8x128xf32>
    %38 = arith.maximumf %36, %37 : vector<8x128xf32>
    %39 = math.absf %36 : vector<8x128xf32>
    %cst_16 = arith.constant 0.000000e+00 : f32
    %40 = vector.broadcast %cst_16 : f32 to vector<8x128xf32>
    %41 = arith.subf %40, %39 : vector<8x128xf32>
    %42 = math.exp %41 : vector<8x128xf32>
    %cst_17 = arith.constant 1.000000e+00 : f32
    %43 = vector.broadcast %cst_17 : f32 to vector<8x128xf32>
    %44 = arith.addf %43, %42 : vector<8x128xf32>
    %45 = math.log %44 : vector<8x128xf32>
    %46 = arith.addf %38, %45 : vector<8x128xf32>
    %cst_18 = arith.constant 0.000000e+00 : f32
    %47 = vector.broadcast %cst_18 : f32 to vector<8x128xf32>
    %48 = arith.subf %47, %46 : vector<8x128xf32>
    %49 = arith.subf %36, %46 : vector<8x128xf32>
    %cst_19 = arith.constant 0.000000e+00 : f32
    %50 = vector.broadcast %cst_19 : f32 to vector<8x128xf32>
    %51 = arith.cmpf oge, %35, %50 : vector<8x128xf32>
    %cst_20 = arith.constant 0.000000e+00 : f32
    %52 = vector.broadcast %cst_20 : f32 to vector<8x128xf32>
    %53 = arith.maximumf %35, %52 : vector<8x128xf32>
    %cst_21 = arith.constant 5.000000e-01 : f32
    %54 = vector.broadcast %cst_21 : f32 to vector<8x128xf32>
    %55 = arith.addf %53, %54 : vector<8x128xf32>
    %56 = math.log %55 : vector<8x128xf32>
    %cst_22 = arith.constant 0.000000e+00 : f32
    %57 = vector.broadcast %cst_22 : f32 to vector<8x128xf32>
    %58 = arith.subf %57, %35 : vector<8x128xf32>
    %cst_23 = arith.constant 0.000000e+00 : f32
    %59 = vector.broadcast %cst_23 : f32 to vector<8x128xf32>
    %60 = arith.maximumf %58, %59 : vector<8x128xf32>
    %61 = math.absf %58 : vector<8x128xf32>
    %cst_24 = arith.constant 0.000000e+00 : f32
    %62 = vector.broadcast %cst_24 : f32 to vector<8x128xf32>
    %63 = arith.subf %62, %61 : vector<8x128xf32>
    %64 = math.exp %63 : vector<8x128xf32>
    %cst_25 = arith.constant 1.000000e+00 : f32
    %65 = vector.broadcast %cst_25 : f32 to vector<8x128xf32>
    %66 = arith.addf %65, %64 : vector<8x128xf32>
    %67 = math.log %66 : vector<8x128xf32>
    %68 = arith.addf %60, %67 : vector<8x128xf32>
    %cst_26 = arith.constant 0.000000e+00 : f32
    %69 = vector.broadcast %cst_26 : f32 to vector<8x128xf32>
    %70 = arith.subf %69, %68 : vector<8x128xf32>
    %71 = arith.select %51, %56, %70 : vector<8x128xi1>, vector<8x128xf32>
    %72 = arith.addf %49, %71 : vector<8x128xf32>
    %73 = tpu.iota {dimensions = array<i32: 0>} : vector<8x8xi32>
    %74 = tpu.iota {dimensions = array<i32: 1>} : vector<8x8xi32>
    %75 = arith.cmpi sle, %74, %73 : vector<8x8xi32>
    %76 = arith.extui %75 : vector<8x8xi1> to vector<8x8xi32>
    %77 = arith.sitofp %76 : vector<8x8xi32> to vector<8x8xf32>
    %cst_27 = arith.constant dense<0.000000e+00> : vector<8x128xf32>
    %78 = tpu.matmul %77, %48, %cst_27 {dimension_numbers = #tpu.dot_dimension_numbers<[1], [0], [0], [1], [0, 0, 1, 1], [], []>} : vector<8x8xf32>, vector<8x128xf32>, vector<8x128xf32> -> vector<8x128xf32>
    %c0_28 = arith.constant 0 : index
    %c0_29 = arith.constant 0 : index
    %79 = vector.load %arg8[%c0_28, %c0_29] : memref<1x128xf32, #tpu.memory_space<vmem>>, vector<1x128xf32>
    %80 = vector.broadcast %79 : vector<1x128xf32> to vector<8x128xf32>
    %81 = arith.addf %80, %78 : vector<8x128xf32>
    %82 = arith.subf %72, %81 : vector<8x128xf32>
    %c0_30 = arith.constant 0 : index
    %c0_31 = arith.constant 0 : index
    %83 = vector.load %arg9[%c0_30, %c0_31] : memref<1x128xf32, #tpu.memory_space<vmem>>, vector<1x128xf32>
    %cst_32 = arith.constant dense<0xFF800000> : vector<128xf32>
    %84 = vector.multi_reduction <maximumf>, %82, %cst_32 [0] : vector<8x128xf32> to vector<128xf32>
    %85 = vector.shape_cast %84 : vector<128xf32> to vector<1x128xf32>
    %86 = arith.maximumf %83, %85 : vector<1x128xf32>
    %87 = vector.broadcast %86 : vector<1x128xf32> to vector<8x128xf32>
    %88 = arith.subf %82, %87 : vector<8x128xf32>
    %89 = math.exp %88 : vector<8x128xf32>
    %cst_33 = arith.constant dense<0.000000e+00> : vector<8x128xf32>
    %90 = tpu.matmul %77, %89, %cst_33 {dimension_numbers = #tpu.dot_dimension_numbers<[1], [0], [0], [1], [0, 0, 1, 1], [], []>} : vector<8x8xf32>, vector<8x128xf32>, vector<8x128xf32> -> vector<8x128xf32>
    %c0_34 = arith.constant 0 : index
    %c0_35 = arith.constant 0 : index
    %91 = vector.load %arg9[%c0_34, %c0_35] : memref<1x128xf32, #tpu.memory_space<vmem>>, vector<1x128xf32>
    %92 = arith.subf %91, %86 : vector<1x128xf32>
    %93 = math.exp %92 : vector<1x128xf32>
    %c0_36 = arith.constant 0 : index
    %c0_37 = arith.constant 0 : index
    %94 = vector.load %arg10[%c0_36, %c0_37] : memref<1x128xf32, #tpu.memory_space<vmem>>, vector<1x128xf32>
    %95 = arith.mulf %93, %94 : vector<1x128xf32>
    %96 = vector.broadcast %95 : vector<1x128xf32> to vector<8x128xf32>
    %97 = arith.addf %90, %96 : vector<8x128xf32>
    %98 = vector.broadcast %86 : vector<1x128xf32> to vector<8x128xf32>
    %99 = arith.addf %81, %98 : vector<8x128xf32>
    %cst_38 = arith.constant 9.99999991E-38 : f32
    %100 = vector.broadcast %cst_38 : f32 to vector<8x128xf32>
    %101 = arith.maximumf %97, %100 : vector<8x128xf32>
    %102 = math.log %101 : vector<8x128xf32>
    %103 = arith.addf %99, %102 : vector<8x128xf32>
    %104 = math.exp %103 : vector<8x128xf32>
    %c0_39 = arith.constant 0 : index
    %c0_40 = arith.constant 0 : index
    %c0_41 = arith.constant 0 : index
    %105 = vector.load %arg6[%c0_39, %c0_40, %c0_41] : memref<1x8x128xf32, #tpu.memory_space<vmem>>, vector<1x8x128xf32>
    %106 = vector.shape_cast %105 : vector<1x8x128xf32> to vector<8x128xf32>
    %107 = vector.shape_cast %104 : vector<8x128xf32> to vector<1x8x128xf32>
    tpu.vector_store %arg6[%c0_39, %c0_40, %c0_41], %107 {strides = array<i32>} : memref<1x8x128xf32, #tpu.memory_space<vmem>>, vector<1x8x128xf32>,
    %108 = vector.extract_strided_slice %81 {offsets = [7, 0], sizes = [1, 128], strides = [1, 1]} : vector<8x128xf32> to vector<1x128xf32>
    %c0_42 = arith.constant 0 : index
    %c0_43 = arith.constant 0 : index
    %109 = vector.load %arg8[%c0_42, %c0_43] : memref<1x128xf32, #tpu.memory_space<vmem>>, vector<1x128xf32>
    tpu.vector_store %arg8[%c0_42, %c0_43], %108 {strides = array<i32>} : memref<1x128xf32, #tpu.memory_space<vmem>>, vector<1x128xf32>,
    %110 = vector.extract_strided_slice %97 {offsets = [7, 0], sizes = [1, 128], strides = [1, 1]} : vector<8x128xf32> to vector<1x128xf32>
    %c0_44 = arith.constant 0 : index
    %c0_45 = arith.constant 0 : index
    %111 = vector.load %arg10[%c0_44, %c0_45] : memref<1x128xf32, #tpu.memory_space<vmem>>, vector<1x128xf32>
    tpu.vector_store %arg10[%c0_44, %c0_45], %110 {strides = array<i32>} : memref<1x128xf32, #tpu.memory_space<vmem>>, vector<1x128xf32>,
    %c0_46 = arith.constant 0 : index
    %c0_47 = arith.constant 0 : index
    %112 = vector.load %arg9[%c0_46, %c0_47] : memref<1x128xf32, #tpu.memory_space<vmem>>, vector<1x128xf32>
    tpu.vector_store %arg9[%c0_46, %c0_47], %86 {strides = array<i32>} : memref<1x128xf32, #tpu.memory_space<vmem>>, vector<1x128xf32>,
    %cst_48 = arith.constant 3.000000e+38 : f32
    %113 = vector.broadcast %cst_48 : f32 to vector<8x128xf32>
    %114 = arith.select %7, %104, %113 : vector<8x128xi1>, vector<8x128xf32>
    %115 = vector.shape_cast %114 : vector<8x128xf32> to vector<1x8x128xf32>
    %cst_49 = arith.constant dense<0x7F800000> : vector<1xf32>
    %116 = vector.multi_reduction <minimumf>, %115, %cst_49 [1, 2] : vector<1x8x128xf32> to vector<1xf32>
    %117 = vector.shape_cast %116 : vector<1xf32> to vector<1x1x1xf32>
    %118 = vector.extract %117[0, 0, 0] : f32 from vector<1x1x1xf32>
    %cst_50 = arith.constant -3.000000e+38 : f32
    %119 = vector.broadcast %cst_50 : f32 to vector<8x128xf32>
    %120 = arith.select %7, %104, %119 : vector<8x128xi1>, vector<8x128xf32>
    %121 = vector.shape_cast %120 : vector<8x128xf32> to vector<1x8x128xf32>
    %cst_51 = arith.constant dense<0xFF800000> : vector<1xf32>
    %122 = vector.multi_reduction <maximumf>, %121, %cst_51 [1, 2] : vector<1x8x128xf32> to vector<1xf32>
    %123 = vector.shape_cast %122 : vector<1xf32> to vector<1x1x1xf32>
    %124 = vector.extract %123[0, 0, 0] : f32 from vector<1x1x1xf32>
    %125 = tpu.iota {dimensions = array<i32: 0>} : vector<2x128xi32>
    %c0_i32_52 = arith.constant 0 : i32
    %126 = vector.broadcast %c0_i32_52 : i32 to vector<2x128xi32>
    %127 = arith.cmpi eq, %125, %126 : vector<2x128xi32>
    %128 = vector.broadcast %118 : f32 to vector<2x128xf32>
    %129 = vector.broadcast %124 : f32 to vector<2x128xf32>
    %130 = arith.select %127, %128, %129 : vector<2x128xi1>, vector<2x128xf32>
    %c0_i32_53 = arith.constant 0 : i32
    %131 = arith.cmpi eq, %arg1, %c0_i32_53 : i32
    %132 = arith.extui %131 : i1 to i32
    %c0_i32_54 = arith.constant 0 : i32
    %133 = arith.cmpi ne, %132, %c0_i32_54 : i32
    scf.if %133 {
      %c0_57 = arith.constant 0 : index
      %c0_58 = arith.constant 0 : index
      %c0_59 = arith.constant 0 : index
      %137 = vector.load %arg7[%c0_57, %c0_58, %c0_59] : memref<1x2x128xf32, #tpu.memory_space<vmem>>, vector<1x2x128xf32>
      %138 = vector.shape_cast %137 : vector<1x2x128xf32> to vector<2x128xf32>
      %139 = vector.shape_cast %130 : vector<2x128xf32> to vector<1x2x128xf32>
      tpu.vector_store %arg7[%c0_57, %c0_58, %c0_59], %139 {strides = array<i32>} : memref<1x2x128xf32, #tpu.memory_space<vmem>>, vector<1x2x128xf32>,
    } else {
    }
    %c0_i32_55 = arith.constant 0 : i32
    %134 = arith.cmpi sgt, %arg1, %c0_i32_55 : i32
    %135 = arith.extui %134 : i1 to i32
    %c0_i32_56 = arith.constant 0 : i32
    %136 = arith.cmpi ne, %135, %c0_i32_56 : i32
    scf.if %136 {
      %c0_57 = arith.constant 0 : index
      %c0_58 = arith.constant 0 : index
      %c0_59 = arith.constant 0 : index
      %137 = vector.load %arg7[%c0_57, %c0_58, %c0_59] : memref<1x2x128xf32, #tpu.memory_space<vmem>>, vector<1x2x128xf32>
      %138 = vector.shape_cast %137 : vector<1x2x128xf32> to vector<2x128xf32>
      %c0_i32_60 = arith.constant 0 : i32
      %139 = vector.broadcast %c0_i32_60 : i32 to vector<2x128xi32>
      %140 = arith.cmpi eq, %125, %139 : vector<2x128xi32>
      %141 = arith.minimumf %138, %130 : vector<2x128xf32>
      %142 = arith.maximumf %138, %130 : vector<2x128xf32>
      %143 = arith.select %140, %141, %142 : vector<2x128xi1>, vector<2x128xf32>
      %c0_61 = arith.constant 0 : index
      %c0_62 = arith.constant 0 : index
      %c0_63 = arith.constant 0 : index
      %144 = vector.load %arg7[%c0_61, %c0_62, %c0_63] : memref<1x2x128xf32, #tpu.memory_space<vmem>>, vector<1x2x128xf32>
      %145 = vector.shape_cast %144 : vector<1x2x128xf32> to vector<2x128xf32>
      %146 = vector.shape_cast %143 : vector<2x128xf32> to vector<1x2x128xf32>
      tpu.vector_store %arg7[%c0_61, %c0_62, %c0_63], %146 {strides = array<i32>} : memref<1x2x128xf32, #tpu.memory_space<vmem>>, vector<1x2x128xf32>,
    } else {
    }
    return
  }
  func.func @transform_0(%arg0: i32, %arg1: i32) -> (i32, i32, i32) {
    %c0_i32 = arith.constant 0 : i32
    %c0_i32_0 = arith.constant 0 : i32
    return %arg0, %arg1, %c0_i32 : i32, i32, i32
  }
  func.func @transform_1(%arg0: i32, %arg1: i32) -> (i32, i32) {
    %c0_i32 = arith.constant 0 : i32
    %c0_i32_0 = arith.constant 0 : i32
    %c0_i32_1 = arith.constant 0 : i32
    return %c0_i32, %c0_i32_0 : i32, i32
  }
  func.func @transform_2(%arg0: i32, %arg1: i32) -> (i32, i32) {
    %c0_i32 = arith.constant 0 : i32
    %c0_i32_0 = arith.constant 0 : i32
    %c0_i32_1 = arith.constant 0 : i32
    return %c0_i32, %c0_i32_0 : i32, i32
  }
  func.func @transform_3(%arg0: i32, %arg1: i32) -> (i32, i32) {
    %c0_i32 = arith.constant 0 : i32
    %c0_i32_0 = arith.constant 0 : i32
    %c0_i32_1 = arith.constant 0 : i32
    return %c0_i32, %c0_i32_0 : i32, i32
  }
  func.func @transform_4(%arg0: i32, %arg1: i32) -> (i32, i32, i32) {
    %c0_i32 = arith.constant 0 : i32
    %c0_i32_0 = arith.constant 0 : i32
    return %arg0, %arg1, %c0_i32 : i32, i32, i32
  }
  func.func @transform_5(%arg0: i32, %arg1: i32) -> (i32, i32, i32) {
    %c0_i32 = arith.constant 0 : i32
    %c0_i32_0 = arith.constant 0 : i32
    %c0_i32_1 = arith.constant 0 : i32
    return %arg0, %c0_i32, %c0_i32_0 : i32, i32, i32
  }
}

module attributes {stable_mosaic.version = 11 : i64} {
  func.func @_stretch_mlp_kernel(%arg0: i32, %arg1: memref<2xf32, #tpu.memory_space<smem>>, %arg2: memref<8x128xf32, #tpu.memory_space<vmem>>, %arg3: memref<8x128xf32, #tpu.memory_space<vmem>>, %arg4: memref<128x128xbf16, #tpu.memory_space<vmem>>, %arg5: memref<1x128xf32, #tpu.memory_space<vmem>>, %arg6: memref<128x128xbf16, #tpu.memory_space<vmem>>, %arg7: memref<1x128xf32, #tpu.memory_space<vmem>>, %arg8: memref<8x128xf32, #tpu.memory_space<vmem>>) attributes {dimension_semantics = [#tpu.dimension_semantics<parallel>], iteration_bounds = array<i64: 2>, scalar_prefetch = 0 : i64, scratch_operands = 0 : i64, tpu.core_type = #tpu.core_type<tc>, window_params = [{transform_indices = @transform_0, window_bounds = array<i64: 2>}, {transform_indices = @transform_1, window_bounds = array<i64: 8, 128>}, {transform_indices = @transform_2, window_bounds = array<i64: 8, 128>}, {pipeline_mode = #tpu.pipeline_mode<synchronous>, transform_indices = @transform_3, window_bounds = array<i64: 128, 128>}, {pipeline_mode = #tpu.pipeline_mode<synchronous>, transform_indices = @transform_4, window_bounds = array<i64: 1, 128>}, {pipeline_mode = #tpu.pipeline_mode<synchronous>, transform_indices = @transform_5, window_bounds = array<i64: 128, 128>}, {pipeline_mode = #tpu.pipeline_mode<synchronous>, transform_indices = @transform_6, window_bounds = array<i64: 1, 128>}, {transform_indices = @transform_7, window_bounds = array<i64: 8, 128>}]} {
    %c0 = arith.constant 0 : index
    %0 = memref.load %arg1[%c0] : memref<2xf32, #tpu.memory_space<smem>>
    %c1 = arith.constant 1 : index
    %1 = memref.load %arg1[%c1] : memref<2xf32, #tpu.memory_space<smem>>
    %c0_0 = arith.constant 0 : index
    %c0_1 = arith.constant 0 : index
    %2 = vector.load %arg2[%c0_0, %c0_1] : memref<8x128xf32, #tpu.memory_space<vmem>>, vector<8x128xf32>
    %c0_2 = arith.constant 0 : index
    %c0_3 = arith.constant 0 : index
    %3 = vector.load %arg3[%c0_2, %c0_3] : memref<8x128xf32, #tpu.memory_space<vmem>>, vector<8x128xf32>
    %4 = arith.subf %1, %0 : f32
    %5 = vector.broadcast %4 : f32 to vector<1x1xf32>
    %cst = arith.constant 0.000000e+00 : f32
    %6 = vector.broadcast %cst : f32 to vector<1x1xf32>
    %7 = arith.cmpf ogt, %5, %6 : vector<1x1xf32>
    %cst_4 = arith.constant 1.000000e+00 : f32
    %8 = vector.broadcast %cst_4 : f32 to vector<1x1xf32>
    %9 = arith.select %7, %5, %8 : vector<1x1xi1>, vector<1x1xf32>
    %10 = tpu.reciprocal %9 : vector<1x1xf32> -> vector<1x1xf32>
    %11 = vector.broadcast %0 : f32 to vector<8x128xf32>
    %12 = arith.subf %2, %11 : vector<8x128xf32>
    %13 = vector.broadcast %10 : vector<1x1xf32> to vector<8x128xf32>
    %14 = arith.mulf %12, %13 : vector<8x128xf32>
    %cst_5 = arith.constant 1.000000e+00 : f32
    %15 = arith.addf %1, %cst_5 : f32
    %16 = vector.broadcast %15 : f32 to vector<8x128xf32>
    %17 = arith.mulf %14, %16 : vector<8x128xf32>
    %cst_6 = arith.constant -1.000000e+00 : f32
    %18 = vector.broadcast %cst_6 : f32 to vector<8x128xf32>
    %19 = arith.addf %18, %17 : vector<8x128xf32>
    %20 = arith.truncf %19 : vector<8x128xf32> to vector<8x128xbf16>
    %c0_7 = arith.constant 0 : index
    %c0_8 = arith.constant 0 : index
    %21 = vector.load %arg4[%c0_7, %c0_8] : memref<128x128xbf16, #tpu.memory_space<vmem>>, vector<128x128xbf16>
    %cst_9 = arith.constant dense<0.000000e+00> : vector<8x128xf32>
    %22 = tpu.matmul %20, %21, %cst_9 {dimension_numbers = #tpu.dot_dimension_numbers<[1], [0], [0], [1], [0, 0, 1, 1], [], []>} : vector<8x128xbf16>, vector<128x128xbf16>, vector<8x128xf32> -> vector<8x128xf32>
    %c0_10 = arith.constant 0 : index
    %c0_11 = arith.constant 0 : index
    %23 = vector.load %arg5[%c0_10, %c0_11] : memref<1x128xf32, #tpu.memory_space<vmem>>, vector<1x128xf32>
    %24 = vector.broadcast %23 : vector<1x128xf32> to vector<8x128xf32>
    %25 = arith.addf %22, %24 : vector<8x128xf32>
    %cst_12 = arith.constant 5.000000e-01 : f32
    %26 = vector.broadcast %cst_12 : f32 to vector<8x128xf32>
    %27 = arith.mulf %26, %25 : vector<8x128xf32>
    %cst_13 = arith.constant 4.471500e-02 : f32
    %28 = vector.broadcast %cst_13 : f32 to vector<8x128xf32>
    %29 = arith.mulf %28, %25 : vector<8x128xf32>
    %30 = arith.mulf %29, %25 : vector<8x128xf32>
    %31 = arith.mulf %30, %25 : vector<8x128xf32>
    %32 = arith.addf %25, %31 : vector<8x128xf32>
    %cst_14 = arith.constant 0.797884583 : f32
    %33 = vector.broadcast %cst_14 : f32 to vector<8x128xf32>
    %34 = arith.mulf %33, %32 : vector<8x128xf32>
    %35 = math.tanh %34 : vector<8x128xf32>
    %cst_15 = arith.constant 1.000000e+00 : f32
    %36 = vector.broadcast %cst_15 : f32 to vector<8x128xf32>
    %37 = arith.addf %36, %35 : vector<8x128xf32>
    %38 = arith.mulf %27, %37 : vector<8x128xf32>
    %39 = arith.truncf %38 : vector<8x128xf32> to vector<8x128xbf16>
    %c0_16 = arith.constant 0 : index
    %c0_17 = arith.constant 0 : index
    %40 = vector.load %arg6[%c0_16, %c0_17] : memref<128x128xbf16, #tpu.memory_space<vmem>>, vector<128x128xbf16>
    %cst_18 = arith.constant dense<0.000000e+00> : vector<8x128xf32>
    %41 = tpu.matmul %39, %40, %cst_18 {dimension_numbers = #tpu.dot_dimension_numbers<[1], [0], [0], [1], [0, 0, 1, 1], [], []>} : vector<8x128xbf16>, vector<128x128xbf16>, vector<8x128xf32> -> vector<8x128xf32>
    %c0_19 = arith.constant 0 : index
    %c0_20 = arith.constant 0 : index
    %42 = vector.load %arg7[%c0_19, %c0_20] : memref<1x128xf32, #tpu.memory_space<vmem>>, vector<1x128xf32>
    %43 = vector.broadcast %42 : vector<1x128xf32> to vector<8x128xf32>
    %44 = arith.addf %41, %43 : vector<8x128xf32>
    %45 = arith.addf %44, %3 : vector<8x128xf32>
    %c0_21 = arith.constant 0 : index
    %c0_22 = arith.constant 0 : index
    %46 = vector.load %arg8[%c0_21, %c0_22] : memref<8x128xf32, #tpu.memory_space<vmem>>, vector<8x128xf32>
    tpu.vector_store %arg8[%c0_21, %c0_22], %45 {strides = array<i32>} : memref<8x128xf32, #tpu.memory_space<vmem>>, vector<8x128xf32>,
    return
  }
  func.func @transform_0(%arg0: i32) -> i32 {
    %c0_i32 = arith.constant 0 : i32
    %c0_i32_0 = arith.constant 0 : i32
    return %c0_i32 : i32
  }
  func.func @transform_1(%arg0: i32) -> (i32, i32) {
    %c0_i32 = arith.constant 0 : i32
    %c0_i32_0 = arith.constant 0 : i32
    return %arg0, %c0_i32 : i32, i32
  }
  func.func @transform_2(%arg0: i32) -> (i32, i32) {
    %c0_i32 = arith.constant 0 : i32
    %c0_i32_0 = arith.constant 0 : i32
    return %arg0, %c0_i32 : i32, i32
  }
  func.func @transform_3(%arg0: i32) -> (i32, i32) {
    %c0_i32 = arith.constant 0 : i32
    %c0_i32_0 = arith.constant 0 : i32
    %c0_i32_1 = arith.constant 0 : i32
    return %c0_i32, %c0_i32_0 : i32, i32
  }
  func.func @transform_4(%arg0: i32) -> (i32, i32) {
    %c0_i32 = arith.constant 0 : i32
    %c0_i32_0 = arith.constant 0 : i32
    %c0_i32_1 = arith.constant 0 : i32
    return %c0_i32, %c0_i32_0 : i32, i32
  }
  func.func @transform_5(%arg0: i32) -> (i32, i32) {
    %c0_i32 = arith.constant 0 : i32
    %c0_i32_0 = arith.constant 0 : i32
    %c0_i32_1 = arith.constant 0 : i32
    return %c0_i32, %c0_i32_0 : i32, i32
  }
  func.func @transform_6(%arg0: i32) -> (i32, i32) {
    %c0_i32 = arith.constant 0 : i32
    %c0_i32_0 = arith.constant 0 : i32
    %c0_i32_1 = arith.constant 0 : i32
    return %c0_i32, %c0_i32_0 : i32, i32
  }
  func.func @transform_7(%arg0: i32) -> (i32, i32) {
    %c0_i32 = arith.constant 0 : i32
    %c0_i32_0 = arith.constant 0 : i32
    return %arg0, %c0_i32 : i32, i32
  }
}

</mosaic_0001>

<llo_original>
// kernel: _forward_impl.3
$region0: #{_forward_impl.3}
  #allocation0 [shape = 'u32[]', space=smem, size = 0x4, offset = 0x4, fixed_abs, tag = 'smem constant byte address 0x4 - core index']
  #allocation1 [shape = 'u32[144,128]{1,0:T(1,128)}', space=vmem, size = 0x12000, scoped, tag = 'internal scratch']
  %s0 = inlined_call_operand.vmem [shape: f32[2], index: 0, kind: input, shape index: {}]
  %s1 = inlined_call_operand.vmem [shape: f32[16,128], index: 1, kind: input, shape index: {}]
  %s2 = inlined_call_operand.vmem [shape: f32[16,128], index: 2, kind: input, shape index: {}]
  %s3 = inlined_call_operand.vmem [shape: bf16[128,128], index: 3, kind: input, shape index: {}]
  %s4 = inlined_call_operand.vmem [shape: f32[1,128], index: 4, kind: input, shape index: {}]
  %s5 = inlined_call_operand.vmem [shape: bf16[128,128], index: 5, kind: input, shape index: {}]
  %s6 = inlined_call_operand.vmem [shape: f32[1,128], index: 6, kind: input, shape index: {}]
  %s7 = inlined_call_operand.vmem [shape: f32[16,128], index: 7, kind: output, shape index: {}]
  %s8 = sld [smem:[#allocation0]]
  $region65: #{_forward_impl.3} parent=0
    _
  %s10 = ssub.s32 1, %s8
  %s11 = scalar_select 0, %s10, %s8
  $region1: #{_forward_impl.3} parent=0
    #allocation2 [shape = 'u8[512]{0}', space=smem, size = 0x200, scoped, tag = 'input window, operand 0, single buffered']
    #allocation3 [shape = 's32[2]{0}', space=sflag, size = 0x8, scoped, tag = 'scoped memory for _forward_impl.3']
    %12 = vsyncpa [#allocation3], 0
    loop: start=0, step=1, limit=4
    $region2: #{_forward_impl.3} parent=1 // loop_pre_header
      _
    $region3: #{_forward_impl.3} parent=1 // loop_header
      %s14 = sphi 0, %s18
      %p15 = scmp.ge.s32.totalorder %s14, 4
      %s22 = sphi 0, %s22
      %s24 = sphi 0, %s22
      %s25 = sphi 0, %s24
      %s39 = sphi 0, %s25
      %s45 = sphi 0, %s47
      %s48 = sphi 0, %s45
      %s49 = sphi 0, %s48
      %s65 = sphi 0, %s49
      %s71 = sphi 0, %s73
      %s74 = sphi 0, %s71
      %s75 = sphi 0, %s74
      %s91 = sphi 0, %s75
      %s95 = sphi 0, %s95
      %s97 = sphi 0, %s95
      %s98 = sphi 0, %s97
      %s112 = sphi 0, %s98
      %s116 = sphi 0, %s116
      %s118 = sphi 0, %s116
      %s119 = sphi 0, %s118
      %s133 = sphi 0, %s119
      %s137 = sphi 0, %s137
      %s139 = sphi 0, %s137
      %s140 = sphi 0, %s139
      %s154 = sphi 0, %s140
      %s158 = sphi 0, %s158
      %s160 = sphi 0, %s158
      %s161 = sphi 0, %s160
      %s175 = sphi 0, %s161
      %s181 = sphi 0, %s183
      %s184 = sphi 0, %s181
      %s185 = sphi 0, %s184
      %s201 = sphi 0, %s185
    $region4: #{_forward_impl.3} parent=1 // loop_header_branch
      %17 = sbr.rel (%p15) target = $region8
    $region5: #{_forward_impl.3} parent=1 // loop_body
      %s19 = ssub.s32 %s14, 1
      %s20 = ssub.s32 %s14, 2
      %s21 = sadd.s32 %s14, 1
      %s23 = sadd.s32 %s22, 1
      %p26 = scmp.eq.s32.totalorder %s14, 1
      %p27 = scmp.ne.s32.totalorder %s22, %s24
      %p28 = scmp.eq.s32.totalorder %s14, 0
      %p29 = por %p27, %p28
      %p30 = scmp.ne.s32.totalorder %s22, %s24
      %p31 = scmp.eq.s32.totalorder %s19, 1
      %p32 = por %p30, %p31
      %p33 = scmp.ne.s32.totalorder %s24, %s25
      %p34 = scmp.eq.s32.totalorder %s19, 0
      %p35 = por %p33, %p34
      %p36 = scmp.ne.s32.totalorder %s24, %s25
      %p37 = scmp.eq.s32.totalorder %s20, 1
      %p38 = por %p36, %p37
      %p40 = scmp.ne.s32.totalorder %s25, %s39
      %p41 = scmp.eq.s32.totalorder %s20, 0
      %p42 = por %p40, %p41
      %s43 = ssub.s32 %s14, %s21
      %p44 = scmp.eq.s32.totalorder %s43, 0
      %s46 = sadd.s32 %s45, 1
      %s47 = scalar_select %p44, %s45, %s46
      %p50 = pneg %p44
      %p51 = scmp.eq.s32.totalorder %s14, 1
      %p52 = por %p50, %p51
      %p53 = scmp.ne.s32.totalorder %s45, %s48
      %p54 = scmp.eq.s32.totalorder %s14, 0
      %p55 = por %p53, %p54
      %p56 = scmp.ne.s32.totalorder %s45, %s48
      %p57 = scmp.eq.s32.totalorder %s19, 1
      %p58 = por %p56, %p57
      %p59 = scmp.ne.s32.totalorder %s48, %s49
      %p60 = scmp.eq.s32.totalorder %s19, 0
      %p61 = por %p59, %p60
      %p62 = scmp.ne.s32.totalorder %s48, %s49
      %p63 = scmp.eq.s32.totalorder %s20, 1
      %p64 = por %p62, %p63
      %p66 = scmp.ne.s32.totalorder %s49, %s65
      %p67 = scmp.eq.s32.totalorder %s20, 0
      %p68 = por %p66, %p67
      %s69 = ssub.s32 %s14, %s21
      %p70 = scmp.eq.s32.totalorder %s69, 0
      %s72 = sadd.s32 %s71, 1
      %s73 = scalar_select %p70, %s71, %s72
      %p76 = pneg %p70
      %p77 = scmp.eq.s32.totalorder %s14, 1
      %p78 = por %p76, %p77
      %p79 = scmp.ne.s32.totalorder %s71, %s74
      %p80 = scmp.eq.s32.totalorder %s14, 0
      %p81 = por %p79, %p80
      %p82 = scmp.ne.s32.totalorder %s71, %s74
      %p83 = scmp.eq.s32.totalorder %s19, 1
      %p84 = por %p82, %p83
      %p85 = scmp.ne.s32.totalorder %s74, %s75
      %p86 = scmp.eq.s32.totalorder %s19, 0
      %p87 = por %p85, %p86
      %p88 = scmp.ne.s32.totalorder %s74, %s75
      %p89 = scmp.eq.s32.totalorder %s20, 1
      %p90 = por %p88, %p89
      %p92 = scmp.ne.s32.totalorder %s75, %s91
      %p93 = scmp.eq.s32.totalorder %s20, 0
      %p94 = por %p92, %p93
      %s96 = sadd.s32 %s95, 1
      %p99 = scmp.eq.s32.totalorder %s14, 1
      %p100 = scmp.ne.s32.totalorder %s95, %s97
      %p101 = scmp.eq.s32.totalorder %s14, 0
      %p102 = por %p100, %p101
      %p103 = scmp.ne.s32.totalorder %s95, %s97
      %p104 = scmp.eq.s32.totalorder %s19, 1
      %p105 = por %p103, %p104
      %p106 = scmp.ne.s32.totalorder %s97, %s98
      %p107 = scmp.eq.s32.totalorder %s19, 0
      %p108 = por %p106, %p107
      %p109 = scmp.ne.s32.totalorder %s97, %s98
      %p110 = scmp.eq.s32.totalorder %s20, 1
      %p111 = por %p109, %p110
      %p113 = scmp.ne.s32.totalorder %s98, %s112
      %p114 = scmp.eq.s32.totalorder %s20, 0
      %p115 = por %p113, %p114
      %s117 = sadd.s32 %s116, 1
      %p120 = scmp.eq.s32.totalorder %s14, 1
      %p121 = scmp.ne.s32.totalorder %s116, %s118
      %p122 = scmp.eq.s32.totalorder %s14, 0
      %p123 = por %p121, %p122
      %p124 = scmp.ne.s32.totalorder %s116, %s118
      %p125 = scmp.eq.s32.totalorder %s19, 1
      %p126 = por %p124, %p125
      %p127 = scmp.ne.s32.totalorder %s118, %s119
      %p128 = scmp.eq.s32.totalorder %s19, 0
      %p129 = por %p127, %p128
      %p130 = scmp.ne.s32.totalorder %s118, %s119
      %p131 = scmp.eq.s32.totalorder %s20, 1
      %p132 = por %p130, %p131
      %p134 = scmp.ne.s32.totalorder %s119, %s133
      %p135 = scmp.eq.s32.totalorder %s20, 0
      %p136 = por %p134, %p135
      %s138 = sadd.s32 %s137, 1
      %p141 = scmp.eq.s32.totalorder %s14, 1
      %p142 = scmp.ne.s32.totalorder %s137, %s139
      %p143 = scmp.eq.s32.totalorder %s14, 0
      %p144 = por %p142, %p143
      %p145 = scmp.ne.s32.totalorder %s137, %s139
      %p146 = scmp.eq.s32.totalorder %s19, 1
      %p147 = por %p145, %p146
      %p148 = scmp.ne.s32.totalorder %s139, %s140
      %p149 = scmp.eq.s32.totalorder %s19, 0
      %p150 = por %p148, %p149
      %p151 = scmp.ne.s32.totalorder %s139, %s140
      %p152 = scmp.eq.s32.totalorder %s20, 1
      %p153 = por %p151, %p152
      %p155 = scmp.ne.s32.totalorder %s140, %s154
      %p156 = scmp.eq.s32.totalorder %s20, 0
      %p157 = por %p155, %p156
      %s159 = sadd.s32 %s158, 1
      %p162 = scmp.eq.s32.totalorder %s14, 1
      %p163 = scmp.ne.s32.totalorder %s158, %s160
      %p164 = scmp.eq.s32.totalorder %s14, 0
      %p165 = por %p163, %p164
      %p166 = scmp.ne.s32.totalorder %s158, %s160
      %p167 = scmp.eq.s32.totalorder %s19, 1
      %p168 = por %p166, %p167
      %p169 = scmp.ne.s32.totalorder %s160, %s161
      %p170 = scmp.eq.s32.totalorder %s19, 0
      %p171 = por %p169, %p170
      %p172 = scmp.ne.s32.totalorder %s160, %s161
      %p173 = scmp.eq.s32.totalorder %s20, 1
      %p174 = por %p172, %p173
      %p176 = scmp.ne.s32.totalorder %s161, %s175
      %p177 = scmp.eq.s32.totalorder %s20, 0
      %p178 = por %p176, %p177
      %s179 = ssub.s32 %s14, %s21
      %p180 = scmp.eq.s32.totalorder %s179, 0
      %s182 = sadd.s32 %s181, 1
      %s183 = scalar_select %p180, %s181, %s182
      %p186 = pneg %p180
      %p187 = scmp.eq.s32.totalorder %s14, 1
      %p188 = por %p186, %p187
      %p189 = scmp.ne.s32.totalorder %s181, %s184
      %p190 = scmp.eq.s32.totalorder %s14, 0
      %p191 = por %p189, %p190
      %p192 = scmp.ne.s32.totalorder %s181, %s184
      %p193 = scmp.eq.s32.totalorder %s19, 1
      %p194 = por %p192, %p193
      %p195 = scmp.ne.s32.totalorder %s184, %s185
      %p196 = scmp.eq.s32.totalorder %s19, 0
      %p197 = por %p195, %p196
      %p198 = scmp.ne.s32.totalorder %s184, %s185
      %p199 = scmp.eq.s32.totalorder %s20, 1
      %p200 = por %p198, %p199
      %p202 = scmp.ne.s32.totalorder %s185, %s201
      %p203 = scmp.eq.s32.totalorder %s20, 0
      %p204 = por %p202, %p203
      %p205 = scmp.le.s32.totalorder 1, %s14
      %p206 = scmp.lt.s32.totalorder %s14, 3
      %p207 = pnand %p205, %p206
      %p208 = pneg %p207
      // Predicated region
      $region9: #{_forward_impl.3} parent=5 // pred_check
        _
      $region10: #{_forward_impl.3} parent=5 // pred_check_branch
        %210 = sbr.rel (%p207) target = $region12
      $region11: #{_forward_impl.3} parent=5 // pred_region
        %s211 = ssub.s32 %s14, 1
        // Predicated region
        $region13: #{_forward_impl.3} parent=11 // pred_check
          %p212 = pneg %p35
        $region14: #{_forward_impl.3} parent=11 // pred_check_branch
          %214 = sbr.rel (%p212) target = $region16
        $region15: #{_forward_impl.3} parent=11 // pred_region
          %s216 = ssub.s32 16, 16
          %217 = vsyncadd [#allocation3], %s216
          %s219 = sshll.u32 %s0, 4
          %s220 = int_to_ptr.vmem [resolvable:$true] %s219
          %222 = dma.vmem_to_smem %s220, 16, [#allocation2], [#allocation3]
        $region16: #{_forward_impl.3} parent=11 // pred_fallthru
          _
        // Predicated region
        $region17: #{_forward_impl.3} parent=11 // pred_check
          %p223 = pneg %p108
        $region18: #{_forward_impl.3} parent=11 // pred_check_branch
          %225 = sbr.rel (%p223) target = $region20
        $region19: #{_forward_impl.3} parent=11 // pred_region
          _
        $region20: #{_forward_impl.3} parent=11 // pred_fallthru
          _
        // Predicated region
        $region21: #{_forward_impl.3} parent=11 // pred_check
          %p226 = pneg %p129
        $region22: #{_forward_impl.3} parent=11 // pred_check_branch
          %228 = sbr.rel (%p226) target = $region24
        $region23: #{_forward_impl.3} parent=11 // pred_region
          _
        $region24: #{_forward_impl.3} parent=11 // pred_fallthru
          _
        // Predicated region
        $region25: #{_forward_impl.3} parent=11 // pred_check
          %p229 = pneg %p150
        $region26: #{_forward_impl.3} parent=11 // pred_check_branch
          %231 = sbr.rel (%p229) target = $region28
        $region27: #{_forward_impl.3} parent=11 // pred_region
          _
        $region28: #{_forward_impl.3} parent=11 // pred_fallthru
          _
        // Predicated region
        $region29: #{_forward_impl.3} parent=11 // pred_check
          %p232 = pneg %p171
        $region30: #{_forward_impl.3} parent=11 // pred_check_branch
          %234 = sbr.rel (%p232) target = $region32
        $region31: #{_forward_impl.3} parent=11 // pred_region
          _
        $region32: #{_forward_impl.3} parent=11 // pred_fallthru
          _
      $region12: #{_forward_impl.3} parent=5 // pred_fallthru
        _
      %p235 = scmp.lt.s32.totalorder %s14, 2
      // Predicated region
      $region33: #{_forward_impl.3} parent=5 // pred_check
        %p236 = pneg %p235
      $region34: #{_forward_impl.3} parent=5 // pred_check_branch
        %238 = sbr.rel (%p236) target = $region36
      $region35: #{_forward_impl.3} parent=5 // pred_region
        // Predicated region
        $region37: #{_forward_impl.3} parent=35 // pred_check
          %p239 = pneg %p55
        $region38: #{_forward_impl.3} parent=35 // pred_check_branch
          %241 = sbr.rel (%p239) target = $region40
        $region39: #{_forward_impl.3} parent=35 // pred_region
          %p242 = scmp.lt.s32.totalorder %s14, 1
          %s243 = scalar_select %p242, %s14, 1
          %s244 = smul.addr %s243, 8
          %s245 = scalar_lea.vmem %s1, %s244
        $region40: #{_forward_impl.3} parent=35 // pred_fallthru
          _
        // Predicated region
        $region41: #{_forward_impl.3} parent=35 // pred_check
          %p246 = pneg %p81
        $region42: #{_forward_impl.3} parent=35 // pred_check_branch
          %248 = sbr.rel (%p246) target = $region44
        $region43: #{_forward_impl.3} parent=35 // pred_region
          %p249 = scmp.lt.s32.totalorder %s14, 1
          %s250 = scalar_select %p249, %s14, 1
          %s251 = smul.addr %s250, 8
          %s252 = scalar_lea.vmem %s2, %s251
        $region44: #{_forward_impl.3} parent=35 // pred_fallthru
          _
      $region36: #{_forward_impl.3} parent=5 // pred_fallthru
        _
      %p253 = scmp.le.s32.totalorder 1, %s14
      %p254 = scmp.lt.s32.totalorder %s14, 3
      %p255 = pnand %p253, %p254
      %p256 = pneg %p255
      // Predicated region
      $region45: #{_forward_impl.3} parent=5 // pred_check
        _
      $region46: #{_forward_impl.3} parent=5 // pred_check_branch
        %258 = sbr.rel (%p255) target = $region48
      $region47: #{_forward_impl.3} parent=5 // pred_region
        %s259 = ssub.s32 %s14, 1
        // Predicated region
        $region49: #{_forward_impl.3} parent=47 // pred_check
          %p260 = pneg %p35
        $region50: #{_forward_impl.3} parent=47 // pred_check_branch
          %262 = sbr.rel (%p260) target = $region52
        $region51: #{_forward_impl.3} parent=47 // pred_region
          %263 = dma.done [#allocation3], 16
        $region52: #{_forward_impl.3} parent=47 // pred_fallthru
          _
        %264 = sfence
        %p265 = pneg %p35
        %p266 = pneg %p32
        %p267 = scmp.lt.s32.totalorder %s19, 1
        %s268 = scalar_select %p267, %s19, 1
        %s269 = smul.addr %s268, 8
        %s270 = scalar_lea.vmem %s1, %s269
        %p271 = pneg %p61
        %p272 = pneg %p58
        %p273 = scmp.lt.s32.totalorder %s19, 1
        %s274 = scalar_select %p273, %s19, 1
        %s275 = smul.addr %s274, 8
        %s276 = scalar_lea.vmem %s2, %s275
        %p277 = pneg %p87
        %p278 = pneg %p84
        %p279 = pneg %p108
        %p280 = pneg %p105
        %p281 = pneg %p129
        %p282 = pneg %p126
        %p283 = pneg %p150
        %p284 = pneg %p147
        %p285 = pneg %p171
        %p286 = pneg %p168
        %p287 = pneg %p197
        %p288 = pneg %p194
        %p289 = scmp.lt.s32.totalorder %s19, 1
        %s290 = scalar_select %p289, %s19, 1
        %s291 = smul.addr %s290, 8
        %s292 = scalar_lea.vmem %s7, %s291
        %p293 = scmp.lt.s32.totalorder %s19, 1
        %s294 = scalar_select %p293, %s19, 1
        %s295 = smul.addr %s294, 8
        %s296 = scalar_lea.vmem %s1, %s295
        %p297 = scmp.lt.s32.totalorder %s19, 1
        %s298 = scalar_select %p297, %s19, 1
        %s299 = smul.addr %s298, 8
        %s300 = scalar_lea.vmem %s2, %s299
        %p301 = scmp.lt.s32.totalorder %s19, 1
        %s302 = scalar_select %p301, %s19, 1
        %s303 = smul.addr %s302, 8
        %s304 = scalar_lea.vmem %s7, %s303
        %s306 = sld [smem:[#allocation2]]
        %s307 = sld [smem:[#allocation2 + $0x1]]
        %v308 = vld [vmem:[%s296] sm:$0xff]
        %v309 = vld [vmem:[%s300] sm:$0xff]
        %s310 = ssub.f32 %s307, %s306
        %v311 = vstv %s310
        %vm312 = vcmp.gt.f32.partialorder %v311, 0.0
        %v313 = vsel %vm312, %v311, 1.0
        %v314 = vrcp.pop %v313
        %v315 = vstv %s306
        %v316 = vsub.f32 %v308, %v315
        %v317 = vmul.f32 %v316, %v314
        %s318 = sadd.f32 %s307, 1.0
        %v319 = vstv %s318
        %v320 = vmul.f32 %v317, %v319
        %v321 = vadd.f32 %v320, -1.0
        %v322 = vpack.c.bf16 %v321, %v321
        %v323 = vld [vmem:[%s3] sm:$0xf]
        %v324 = vld [vmem:[%s3 + $0x4] sm:$0xf]
        %v325 = vld [vmem:[%s3 + $0x8] sm:$0xf]
        %v326 = vld [vmem:[%s3 + $0xc] sm:$0xf]
        %v327 = vld [vmem:[%s3 + $0x10] sm:$0xf]
        %v328 = vld [vmem:[%s3 + $0x14] sm:$0xf]
        %v329 = vld [vmem:[%s3 + $0x18] sm:$0xf]
        %v330 = vld [vmem:[%s3 + $0x1c] sm:$0xf]
        %v331 = vld [vmem:[%s3 + $0x20] sm:$0xf]
        %v332 = vld [vmem:[%s3 + $0x24] sm:$0xf]
        %v333 = vld [vmem:[%s3 + $0x28] sm:$0xf]
        %v334 = vld [vmem:[%s3 + $0x2c] sm:$0xf]
        %v335 = vld [vmem:[%s3 + $0x30] sm:$0xf]
        %v336 = vld [vmem:[%s3 + $0x34] sm:$0xf]
        %v337 = vld [vmem:[%s3 + $0x38] sm:$0xf]
        %v338 = vld [vmem:[%s3 + $0x3c] sm:$0xf]
        %v339 = vld [vmem:[%s4] sm:$0x1]
        %v341 = vlaneseq
        %v342 = vshrl.u32 %v341, 7
        %v343 = vsub.s32 0, %v342
        %v344 = vrot.slane %v339, %v343
        %v362 = vunpack.c.l.b16 %v323
        %v363 = vunpack.c.l.b16 %v324
        %v364 = vunpack.c.l.b16 %v325
        %v365 = vunpack.c.l.b16 %v326
        %v366 = vunpack.c.l.b16 %v327
        %v367 = vunpack.c.l.b16 %v328
        %v368 = vunpack.c.l.b16 %v329
        %v369 = vunpack.c.l.b16 %v330
        %v370 = vunpack.c.l.b16 %v331
        %v371 = vunpack.c.l.b16 %v332
        %v372 = vunpack.c.l.b16 %v333
        %v373 = vunpack.c.l.b16 %v334
        %v374 = vunpack.c.l.b16 %v335
        %v375 = vunpack.c.l.b16 %v336
        %v376 = vunpack.c.l.b16 %v337
        %v377 = vunpack.c.l.b16 %v338
        %v378 = vpack.c.b16 %v363, %v362
        %v379 = vpack.c.b16 %v365, %v364
        %v380 = vpack.c.b16 %v367, %v366
        %v381 = vpack.c.b16 %v369, %v368
        %v382 = vpack.c.b16 %v371, %v370
        %v383 = vpack.c.b16 %v373, %v372
        %v384 = vpack.c.b16 %v375, %v374
        %v385 = vpack.c.b16 %v377, %v376
        %394 = vmatprep.subr.bf16.mxu0 0
        %395 = vmatpush1.bf16.msra.mxu0 %v378
        %396 = vmatprep.subr.bf16.mxu0 0
        %397 = vmatpush1.bf16.msra.mxu0 %v379
        %398 = vmatprep.subr.bf16.mxu0 0
        %399 = vmatpush1.bf16.msra.mxu0 %v380
        %400 = vmatprep.subr.bf16.mxu0 0
        %401 = vmatpush1.bf16.msra.mxu0 %v381
        %402 = vmatprep.subr.bf16.mxu0 0
        %403 = vmatpush1.bf16.msra.mxu0 %v382
        %404 = vmatprep.subr.bf16.mxu0 0
        %405 = vmatpush1.bf16.msra.mxu0 %v383
        %406 = vmatprep.subr.bf16.mxu0 0
        %407 = vmatpush1.bf16.msra.mxu0 %v384
        %408 = vmatprep.subr.bf16.mxu0 0
        %409 = vmatpush1.bf16.msra.mxu0 %v385
        %410 = vmatprep.subr.bf16.mxu0 0
        %411 = vmatpush1.bf16.msra.mxu0 0
        %412 = vmatprep.subr.bf16.mxu0 0
        %413 = vmatpush1.bf16.msra.mxu0 0
        %414 = vmatprep.subr.bf16.mxu0 0
        %415 = vmatpush1.bf16.msra.mxu0 0
        %416 = vmatprep.subr.bf16.mxu0 0
        %417 = vmatpush1.bf16.msra.mxu0 0
        %418 = vmatprep.subr.bf16.mxu0 0
        %419 = vmatpush1.bf16.msra.mxu0 0
        %420 = vmatprep.subr.bf16.mxu0 0
        %421 = vmatpush1.bf16.msra.mxu0 0
        %422 = vmatprep.subr.bf16.mxu0 0
        %423 = vmatpush1.bf16.msra.mxu0 0
        %424 = vmatprep.subr.bf16.mxu0 0
        %425 = vmatpush1.bf16.msra.mxu0 0
        %426 = vmatprep.mubr.bf16.mxu0 0
        %427 = vmatmul.mubr.bf16.gmra.mrb[0].mxu0 %v322
        %v428 = vpop.f32.mrb[0].mxu0
        %v429 = vadd.f32 %v344, %v428
        %v430 = vpop.f32.mrb[0].mxu0
        %v431 = vpop.f32.mrb[0].mxu0
        %v432 = vpop.f32.mrb[0].mxu0
        %433 = vdwg.mxu0
        %v434 = vmul.f32 %v429, 0.5
        %v435 = vmul.f32 %v429, 0.044715
        %v436 = vmul.f32 %v435, %v429
        %v437 = vmul.f32 %v436, %v429
        %v438 = vadd.f32 %v429, %v437
        %v439 = vmul.f32 %v438, 0.7978846
        %v440 = vtanh.pop %v439
        %v441 = vadd.f32 %v440, 1.0
        %v442 = vmul.f32 %v434, %v441
        %v443 = vpack.c.bf16 %v442, %v442
        %v444 = vld [vmem:[%s5] sm:$0xf]
        %v445 = vld [vmem:[%s5 + $0x4] sm:$0xf]
        %v446 = vld [vmem:[%s5 + $0x8] sm:$0xf]
        %v447 = vld [vmem:[%s5 + $0xc] sm:$0xf]
        %v448 = vld [vmem:[%s5 + $0x10] sm:$0xf]
        %v449 = vld [vmem:[%s5 + $0x14] sm:$0xf]
        %v450 = vld [vmem:[%s5 + $0x18] sm:$0xf]
        %v451 = vld [vmem:[%s5 + $0x1c] sm:$0xf]
        %v452 = vld [vmem:[%s5 + $0x20] sm:$0xf]
        %v453 = vld [vmem:[%s5 + $0x24] sm:$0xf]
        %v454 = vld [vmem:[%s5 + $0x28] sm:$0xf]
        %v455 = vld [vmem:[%s5 + $0x2c] sm:$0xf]
        %v456 = vld [vmem:[%s5 + $0x30] sm:$0xf]
        %v457 = vld [vmem:[%s5 + $0x34] sm:$0xf]
        %v458 = vld [vmem:[%s5 + $0x38] sm:$0xf]
        %v459 = vld [vmem:[%s5 + $0x3c] sm:$0xf]
        %v460 = vld [vmem:[%s6] sm:$0x1]
        %v462 = vlaneseq
        %v463 = vshrl.u32 %v462, 7
        %v464 = vsub.s32 0, %v463
        %v465 = vrot.slane %v460, %v464
        %v483 = vunpack.c.l.b16 %v444
        %v484 = vunpack.c.l.b16 %v445
        %v485 = vunpack.c.l.b16 %v446
        %v486 = vunpack.c.l.b16 %v447
        %v487 = vunpack.c.l.b16 %v448
        %v488 = vunpack.c.l.b16 %v449
        %v489 = vunpack.c.l.b16 %v450
        %v490 = vunpack.c.l.b16 %v451
        %v491 = vunpack.c.l.b16 %v452
        %v492 = vunpack.c.l.b16 %v453
        %v493 = vunpack.c.l.b16 %v454
        %v494 = vunpack.c.l.b16 %v455
        %v495 = vunpack.c.l.b16 %v456
        %v496 = vunpack.c.l.b16 %v457
        %v497 = vunpack.c.l.b16 %v458
        %v498 = vunpack.c.l.b16 %v459
        %v499 = vpack.c.b16 %v484, %v483
        %v500 = vpack.c.b16 %v486, %v485
        %v501 = vpack.c.b16 %v488, %v487
        %v502 = vpack.c.b16 %v490, %v489
        %v503 = vpack.c.b16 %v492, %v491
        %v504 = vpack.c.b16 %v494, %v493
        %v505 = vpack.c.b16 %v496, %v495
        %v506 = vpack.c.b16 %v498, %v497
        %515 = vmatprep.subr.bf16.mxu0 0
        %516 = vmatpush1.bf16.msra.mxu0 %v499
        %517 = vmatprep.subr.bf16.mxu0 0
        %518 = vmatpush1.bf16.msra.mxu0 %v500
        %519 = vmatprep.subr.bf16.mxu0 0
        %520 = vmatpush1.bf16.msra.mxu0 %v501
        %521 = vmatprep.subr.bf16.mxu0 0
        %522 = vmatpush1.bf16.msra.mxu0 %v502
        %523 = vmatprep.subr.bf16.mxu0 0
        %524 = vmatpush1.bf16.msra.mxu0 %v503
        %525 = vmatprep.subr.bf16.mxu0 0
        %526 = vmatpush1.bf16.msra.mxu0 %v504
        %527 = vmatprep.subr.bf16.mxu0 0
        %528 = vmatpush1.bf16.msra.mxu0 %v505
        %529 = vmatprep.subr.bf16.mxu0 0
        %530 = vmatpush1.bf16.msra.mxu0 %v506
        %531 = vmatprep.subr.bf16.mxu0 0
        %532 = vmatpush1.bf16.msra.mxu0 0
        %533 = vmatprep.subr.bf16.mxu0 0
        %534 = vmatpush1.bf16.msra.mxu0 0
        %535 = vmatprep.subr.bf16.mxu0 0
        %536 = vmatpush1.bf16.msra.mxu0 0
        %537 = vmatprep.subr.bf16.mxu0 0
        %538 = vmatpush1.bf16.msra.mxu0 0
        %539 = vmatprep.subr.bf16.mxu0 0
        %540 = vmatpush1.bf16.msra.mxu0 0
        %541 = vmatprep.subr.bf16.mxu0 0
        %542 = vmatpush1.bf16.msra.mxu0 0
        %543 = vmatprep.subr.bf16.mxu0 0
        %544 = vmatpush1.bf16.msra.mxu0 0
        %545 = vmatprep.subr.bf16.mxu0 0
        %546 = vmatpush1.bf16.msra.mxu0 0
        %547 = vmatprep.mubr.bf16.mxu0 0
        %548 = vmatmul.mubr.bf16.gmra.mrb[0].mxu0 %v443
        %v549 = vpop.f32.mrb[0].mxu0
        %v550 = vadd.f32 %v465, %v549
        %v551 = vpop.f32.mrb[0].mxu0
        %v552 = vpop.f32.mrb[0].mxu0
        %v553 = vpop.f32.mrb[0].mxu0
        %554 = vdwg.mxu0
        %v555 = vadd.f32 %v550, %v309
        %556 = vst [vmem:[%s304] sm:$0xff] %v555
        %p557 = scmp.lt.s32.totalorder %s19, 1
        %s558 = scalar_select %p557, %s19, 1
        %s559 = smul.addr %s558, 8
        %s560 = scalar_lea.vmem %s7, %s559
        // Predicated region
        $region53: #{_forward_impl.3} parent=47 // pred_check
          %p561 = pneg %p194
        $region54: #{_forward_impl.3} parent=47 // pred_check_branch
          %563 = sbr.rel (%p561) target = $region56
        $region55: #{_forward_impl.3} parent=47 // pred_region
          _
        $region56: #{_forward_impl.3} parent=47 // pred_fallthru
          _
      $region48: #{_forward_impl.3} parent=5 // pred_fallthru
        _
      %p564 = scmp.le.s32.totalorder 2, %s14
      // Predicated region
      $region57: #{_forward_impl.3} parent=5 // pred_check
        %p565 = pneg %p564
      $region58: #{_forward_impl.3} parent=5 // pred_check_branch
        %567 = sbr.rel (%p565) target = $region60
      $region59: #{_forward_impl.3} parent=5 // pred_region
        %s568 = ssub.s32 %s14, 2
        // Predicated region
        $region61: #{_forward_impl.3} parent=59 // pred_check
          %p569 = pneg %p200
        $region62: #{_forward_impl.3} parent=59 // pred_check_branch
          %571 = sbr.rel (%p569) target = $region64
        $region63: #{_forward_impl.3} parent=59 // pred_region
          %p572 = scmp.lt.s32.totalorder %s20, 1
          %s573 = scalar_select %p572, %s20, 1
          %s574 = smul.addr %s573, 8
          %s575 = scalar_lea.vmem %s7, %s574
        $region64: #{_forward_impl.3} parent=59 // pred_fallthru
          _
      $region60: #{_forward_impl.3} parent=5 // pred_fallthru
        _
    $region6: #{_forward_impl.3} parent=1 // loop_footer
      %s18 = sadd.s32 1, %s14
    $region7: #{_forward_impl.3} parent=1 // loop_footer_branch
      %13 = sbr.rel target = $region3
    $region8: #{_forward_impl.3} parent=1 // loop_exit
      _
    %576 = vsyncpa [#allocation3], 1
    %s577 = scalar_lea.sflag [#allocation3], 1
    %578 = vsyncpa %s577, 1

// kernel: _forward_impl.2
$region0: #{_forward_impl.2}
  #allocation0 [shape = 'u32[]', space=smem, size = 0x4, offset = 0x4, fixed_abs, tag = 'smem constant byte address 0x4 - core index']
  #allocation1 [shape = 'u32[144,128]{1,0:T(1,128)}', space=vmem, size = 0x12000, scoped, tag = 'internal scratch']
  #allocation2 [shape = 'f32[1,128]{1,0:T(1,128)}', space=vmem, size = 0x200, scoped, tag = 'scratch operand']
  #allocation3 [shape = 'f32[1,128]{1,0:T(1,128)}', space=vmem, size = 0x200, scoped, tag = 'scratch operand']
  #allocation4 [shape = 'f32[1,128]{1,0:T(1,128)}', space=vmem, size = 0x200, scoped, tag = 'scratch operand']
  %s0 = inlined_call_operand.vmem [shape: f32[2,8,128], index: 0, kind: input, shape index: {}]
  %s1 = inlined_call_operand.vmem [shape: f32[1,128], index: 1, kind: input, shape index: {}]
  %s2 = inlined_call_operand.vmem [shape: f32[1,128], index: 2, kind: input, shape index: {}]
  %s3 = inlined_call_operand.vmem [shape: bf16[128,256], index: 3, kind: input, shape index: {}]
  %s4 = inlined_call_operand.vmem [shape: f32[2,8,128], index: 4, kind: output, shape index: {0}]
  %s5 = inlined_call_operand.vmem [shape: f32[2,2,128], index: 5, kind: output, shape index: {1}]
  %6 = xla_tuple %s4, %s5
  %s7 = sld [smem:[#allocation0]]
  $region69: #{_forward_impl.2} parent=0
    _
  %s9 = ssub.s32 1, %s7
  %s10 = scalar_select 0, %s9, %s7
  loop: start=0, step=1, limit=4
  $region2: #{_forward_impl.2} parent=0 // loop_pre_header
    _
  $region3: #{_forward_impl.2} parent=0 // loop_header
    %s12 = sphi 0, %s16
    %p13 = scmp.ge.s32.totalorder %s12, 4
    %s19 = sphi 0, %s31
    %s20 = sphi 0, %s27
    %s21 = sphi 0, %s19
    %s22 = sphi 0, %s20
    %s23 = sphi 0, %s21
    %s24 = sphi 0, %s22
    %s36 = sphi 0, %s38
    %s39 = sphi 0, %s36
    %s40 = sphi 0, %s39
    %s56 = sphi 0, %s40
    %s60 = sphi 0, %s60
    %s62 = sphi 0, %s60
    %s63 = sphi 0, %s62
    %s77 = sphi 0, %s63
    %s81 = sphi 0, %s81
    %s83 = sphi 0, %s81
    %s84 = sphi 0, %s83
    %s98 = sphi 0, %s84
    %s102 = sphi 0, %s102
    %s104 = sphi 0, %s102
    %s105 = sphi 0, %s104
    %s119 = sphi 0, %s105
    %s127 = sphi 0, %s129
    %s130 = sphi 0, %s127
    %s131 = sphi 0, %s130
    %s147 = sphi 0, %s131
    %s153 = sphi 0, %s155
    %s156 = sphi 0, %s153
    %s157 = sphi 0, %s156
    %s173 = sphi 0, %s157
  $region4: #{_forward_impl.2} parent=0 // loop_header_branch
    %15 = sbr.rel (%p13) target = $region8
  $region5: #{_forward_impl.2} parent=0 // loop_body
    %s17 = ssub.s32 %s12, 1
    %s18 = ssub.s32 %s12, 2
    %s25 = sadd.s32 1, %s20
    %p26 = scmp.ge.s32.totalorder %s25, 1
    %s27 = scalar_select %p26, 0, %s25
    %s28 = sadd.s32 1, %s19
    %s29 = scalar_select %p26, %s28, %s19
    %p30 = scmp.ge.s32.totalorder %s29, 2
    %s31 = scalar_select %p30, 0, %s29
    %s32 = ssub.s32 %s19, %s31
    %s33 = ssub.s32 %s20, %s27
    %s34 = sor.u32 %s32, %s33
    %p35 = scmp.eq.s32.totalorder %s34, 0
    %s37 = sadd.s32 %s36, 1
    %s38 = scalar_select %p35, %s36, %s37
    %p41 = pneg %p35
    %p42 = scmp.eq.s32.totalorder %s12, 1
    %p43 = por %p41, %p42
    %p44 = scmp.ne.s32.totalorder %s36, %s39
    %p45 = scmp.eq.s32.totalorder %s12, 0
    %p46 = por %p44, %p45
    %p47 = scmp.ne.s32.totalorder %s36, %s39
    %p48 = scmp.eq.s32.totalorder %s17, 1
    %p49 = por %p47, %p48
    %p50 = scmp.ne.s32.totalorder %s39, %s40
    %p51 = scmp.eq.s32.totalorder %s17, 0
    %p52 = por %p50, %p51
    %p53 = scmp.ne.s32.totalorder %s39, %s40
    %p54 = scmp.eq.s32.totalorder %s18, 1
    %p55 = por %p53, %p54
    %p57 = scmp.ne.s32.totalorder %s40, %s56
    %p58 = scmp.eq.s32.totalorder %s18, 0
    %p59 = por %p57, %p58
    %s61 = sadd.s32 %s60, 1
    %p64 = scmp.eq.s32.totalorder %s12, 1
    %p65 = scmp.ne.s32.totalorder %s60, %s62
    %p66 = scmp.eq.s32.totalorder %s12, 0
    %p67 = por %p65, %p66
    %p68 = scmp.ne.s32.totalorder %s60, %s62
    %p69 = scmp.eq.s32.totalorder %s17, 1
    %p70 = por %p68, %p69
    %p71 = scmp.ne.s32.totalorder %s62, %s63
    %p72 = scmp.eq.s32.totalorder %s17, 0
    %p73 = por %p71, %p72
    %p74 = scmp.ne.s32.totalorder %s62, %s63
    %p75 = scmp.eq.s32.totalorder %s18, 1
    %p76 = por %p74, %p75
    %p78 = scmp.ne.s32.totalorder %s63, %s77
    %p79 = scmp.eq.s32.totalorder %s18, 0
    %p80 = por %p78, %p79
    %s82 = sadd.s32 %s81, 1
    %p85 = scmp.eq.s32.totalorder %s12, 1
    %p86 = scmp.ne.s32.totalorder %s81, %s83
    %p87 = scmp.eq.s32.totalorder %s12, 0
    %p88 = por %p86, %p87
    %p89 = scmp.ne.s32.totalorder %s81, %s83
    %p90 = scmp.eq.s32.totalorder %s17, 1
    %p91 = por %p89, %p90
    %p92 = scmp.ne.s32.totalorder %s83, %s84
    %p93 = scmp.eq.s32.totalorder %s17, 0
    %p94 = por %p92, %p93
    %p95 = scmp.ne.s32.totalorder %s83, %s84
    %p96 = scmp.eq.s32.totalorder %s18, 1
    %p97 = por %p95, %p96
    %p99 = scmp.ne.s32.totalorder %s84, %s98
    %p100 = scmp.eq.s32.totalorder %s18, 0
    %p101 = por %p99, %p100
    %s103 = sadd.s32 %s102, 1
    %p106 = scmp.eq.s32.totalorder %s12, 1
    %p107 = scmp.ne.s32.totalorder %s102, %s104
    %p108 = scmp.eq.s32.totalorder %s12, 0
    %p109 = por %p107, %p108
    %p110 = scmp.ne.s32.totalorder %s102, %s104
    %p111 = scmp.eq.s32.totalorder %s17, 1
    %p112 = por %p110, %p111
    %p113 = scmp.ne.s32.totalorder %s104, %s105
    %p114 = scmp.eq.s32.totalorder %s17, 0
    %p115 = por %p113, %p114
    %p116 = scmp.ne.s32.totalorder %s104, %s105
    %p117 = scmp.eq.s32.totalorder %s18, 1
    %p118 = por %p116, %p117
    %p120 = scmp.ne.s32.totalorder %s105, %s119
    %p121 = scmp.eq.s32.totalorder %s18, 0
    %p122 = por %p120, %p121
    %s123 = ssub.s32 %s19, %s31
    %s124 = ssub.s32 %s20, %s27
    %s125 = sor.u32 %s123, %s124
    %p126 = scmp.eq.s32.totalorder %s125, 0
    %s128 = sadd.s32 %s127, 1
    %s129 = scalar_select %p126, %s127, %s128
    %p132 = pneg %p126
    %p133 = scmp.eq.s32.totalorder %s12, 1
    %p134 = por %p132, %p133
    %p135 = scmp.ne.s32.totalorder %s127, %s130
    %p136 = scmp.eq.s32.totalorder %s12, 0
    %p137 = por %p135, %p136
    %p138 = scmp.ne.s32.totalorder %s127, %s130
    %p139 = scmp.eq.s32.totalorder %s17, 1
    %p140 = por %p138, %p139
    %p141 = scmp.ne.s32.totalorder %s130, %s131
    %p142 = scmp.eq.s32.totalorder %s17, 0
    %p143 = por %p141, %p142
    %p144 = scmp.ne.s32.totalorder %s130, %s131
    %p145 = scmp.eq.s32.totalorder %s18, 1
    %p146 = por %p144, %p145
    %p148 = scmp.ne.s32.totalorder %s131, %s147
    %p149 = scmp.eq.s32.totalorder %s18, 0
    %p150 = por %p148, %p149
    %s151 = ssub.s32 %s19, %s31
    %p152 = scmp.eq.s32.totalorder %s151, 0
    %s154 = sadd.s32 %s153, 1
    %s155 = scalar_select %p152, %s153, %s154
    %p158 = pneg %p152
    %p159 = scmp.eq.s32.totalorder %s12, 1
    %p160 = por %p158, %p159
    %p161 = scmp.ne.s32.totalorder %s153, %s156
    %p162 = scmp.eq.s32.totalorder %s12, 0
    %p163 = por %p161, %p162
    %p164 = scmp.ne.s32.totalorder %s153, %s156
    %p165 = scmp.eq.s32.totalorder %s17, 1
    %p166 = por %p164, %p165
    %p167 = scmp.ne.s32.totalorder %s156, %s157
    %p168 = scmp.eq.s32.totalorder %s17, 0
    %p169 = por %p167, %p168
    %p170 = scmp.ne.s32.totalorder %s156, %s157
    %p171 = scmp.eq.s32.totalorder %s18, 1
    %p172 = por %p170, %p171
    %p174 = scmp.ne.s32.totalorder %s157, %s173
    %p175 = scmp.eq.s32.totalorder %s18, 0
    %p176 = por %p174, %p175
    %p177 = scmp.le.s32.totalorder 1, %s12
    %p178 = scmp.lt.s32.totalorder %s12, 3
    %p179 = pnand %p177, %p178
    %p180 = pneg %p179
    // Predicated region
    $region9: #{_forward_impl.2} parent=5 // pred_check
      _
    $region10: #{_forward_impl.2} parent=5 // pred_check_branch
      %182 = sbr.rel (%p179) target = $region12
    $region11: #{_forward_impl.2} parent=5 // pred_region
      %s183 = ssub.s32 %s12, 1
      // Predicated region
      $region13: #{_forward_impl.2} parent=11 // pred_check
        %p184 = pneg %p73
      $region14: #{_forward_impl.2} parent=11 // pred_check_branch
        %186 = sbr.rel (%p184) target = $region16
      $region15: #{_forward_impl.2} parent=11 // pred_region
        _
      $region16: #{_forward_impl.2} parent=11 // pred_fallthru
        _
      // Predicated region
      $region17: #{_forward_impl.2} parent=11 // pred_check
        %p187 = pneg %p94
      $region18: #{_forward_impl.2} parent=11 // pred_check_branch
        %189 = sbr.rel (%p187) target = $region20
      $region19: #{_forward_impl.2} parent=11 // pred_region
        _
      $region20: #{_forward_impl.2} parent=11 // pred_fallthru
        _
      // Predicated region
      $region21: #{_forward_impl.2} parent=11 // pred_check
        %p190 = pneg %p115
      $region22: #{_forward_impl.2} parent=11 // pred_check_branch
        %192 = sbr.rel (%p190) target = $region24
      $region23: #{_forward_impl.2} parent=11 // pred_region
        _
      $region24: #{_forward_impl.2} parent=11 // pred_fallthru
        _
    $region12: #{_forward_impl.2} parent=5 // pred_fallthru
      _
    %p193 = scmp.lt.s32.totalorder %s12, 2
    // Predicated region
    $region25: #{_forward_impl.2} parent=5 // pred_check
      %p194 = pneg %p193
    $region26: #{_forward_impl.2} parent=5 // pred_check_branch
      %196 = sbr.rel (%p194) target = $region28
    $region27: #{_forward_impl.2} parent=5 // pred_region
      // Predicated region
      $region29: #{_forward_impl.2} parent=27 // pred_check
        %p197 = pneg %p46
      $region30: #{_forward_impl.2} parent=27 // pred_check_branch
        %199 = sbr.rel (%p197) target = $region32
      $region31: #{_forward_impl.2} parent=27 // pred_region
        %p200 = scmp.lt.s32.totalorder %s19, 1
        %s201 = scalar_select %p200, %s19, 1
        %p202 = scmp.lt.s32.totalorder %s20, 0
        %s203 = scalar_select %p202, %s20, 0
        %s204 = sadd.s32 %s203, %s201
        %s205 = smul.addr %s204, 8
        %s206 = scalar_lea.vmem %s0, %s205
      $region32: #{_forward_impl.2} parent=27 // pred_fallthru
        _
    $region28: #{_forward_impl.2} parent=5 // pred_fallthru
      _
    %p207 = scmp.le.s32.totalorder 1, %s12
    %p208 = scmp.lt.s32.totalorder %s12, 3
    %p209 = pnand %p207, %p208
    %p210 = pneg %p209
    // Predicated region
    $region33: #{_forward_impl.2} parent=5 // pred_check
      _
    $region34: #{_forward_impl.2} parent=5 // pred_check_branch
      %212 = sbr.rel (%p209) target = $region36
    $region35: #{_forward_impl.2} parent=5 // pred_region
      %s213 = ssub.s32 %s12, 1
      %p214 = scmp.lt.s32.totalorder %s21, 1
      %s215 = scalar_select %p214, %s21, 1
      %p216 = scmp.lt.s32.totalorder %s22, 0
      %s217 = scalar_select %p216, %s22, 0
      %s218 = sadd.s32 %s217, %s215
      %s219 = smul.addr %s218, 8
      %s220 = scalar_lea.vmem %s0, %s219
      %p221 = pneg %p52
      %p222 = pneg %p49
      %p223 = pneg %p73
      %p224 = pneg %p70
      %p225 = pneg %p94
      %p226 = pneg %p91
      %p227 = pneg %p115
      %p228 = pneg %p112
      %p229 = pneg %p143
      %p230 = pneg %p140
      %p231 = scmp.lt.s32.totalorder %s21, 1
      %s232 = scalar_select %p231, %s21, 1
      %p233 = scmp.lt.s32.totalorder %s22, 0
      %s234 = scalar_select %p233, %s22, 0
      %s235 = sadd.s32 %s234, %s232
      %s236 = smul.addr %s235, 8
      %s237 = scalar_lea.vmem %s4, %s236
      %p238 = pneg %p169
      %p239 = pneg %p166
      %p240 = scmp.lt.s32.totalorder %s21, 1
      %s241 = scalar_select %p240, %s21, 1
      %s242 = smul.addr %s241, 2
      %s243 = scalar_lea.vmem %s5, %s242
      %p244 = scmp.lt.s32.totalorder %s21, 1
      %s245 = scalar_select %p244, %s21, 1
      %p246 = scmp.lt.s32.totalorder %s22, 0
      %s247 = scalar_select %p246, %s22, 0
      %s248 = sadd.s32 %s247, %s245
      %s249 = smul.addr %s248, 8
      %s250 = scalar_lea.vmem %s0, %s249
      %p251 = scmp.lt.s32.totalorder %s21, 1
      %s252 = scalar_select %p251, %s21, 1
      %p253 = scmp.lt.s32.totalorder %s22, 0
      %s254 = scalar_select %p253, %s22, 0
      %s255 = sadd.s32 %s254, %s252
      %s256 = smul.addr %s255, 8
      %s257 = scalar_lea.vmem %s4, %s256
      %p258 = scmp.lt.s32.totalorder %s21, 1
      %s259 = scalar_select %p258, %s21, 1
      %s260 = smul.addr %s259, 2
      %s261 = scalar_lea.vmem %s5, %s260
      %p263 = scmp.eq.s32.totalorder %s22, 0
      // Predicated region
      $region37: #{_forward_impl.2} parent=35 // pred_check
        %p264 = pneg %p263
      $region38: #{_forward_impl.2} parent=35 // pred_check_branch
        %266 = sbr.rel (%p264) target = $region40
      $region39: #{_forward_impl.2} parent=35 // pred_region
        %267 = vst [vmem:[#allocation2] sm:$0x1] 0.0
        %268 = vst [vmem:[#allocation3] sm:$0x1] -1e+30
        %269 = vst [vmem:[#allocation4] sm:$0x1] 0.0
      $region40: #{_forward_impl.2} parent=35 // pred_fallthru
        _
      %v270 = vld [vmem:[%s250] sm:$0xff]
      %v271 = vlaneseq
      %v272 = vand.u32 %v271, 127
      %vm273 = vcmp.lt.s32.totalorder %v272, 32
      %274 = vadd.xlane.f32.xlu0 %v270
      %v275 = vpop.xlane.xlu0 %274
      %v276 = vmul.f32 %v275, 0.03125
      %v277 = vsub.f32 %v270, %v276
      %v278 = vsel %vm273, %v277, 0.0
      %v279 = vmul.f32 %v278, %v278
      %280 = vadd.xlane.f32.xlu0 %v279
      %v281 = vpop.xlane.xlu0 %280
      %v282 = vmul.f32 %v281, 0.03125
      %v283 = vadd.f32 %v282, 1e-05
      %v284 = vrsqrt.pop %v283
      %v285 = vmul.f32 %v278, %v284
      %v286 = vld [vmem:[%s1] sm:$0x1]
      %v288 = vlaneseq
      %v289 = vshrl.u32 %v288, 7
      %v290 = vsub.s32 0, %v289
      %v291 = vrot.slane %v286, %v290
      %v293 = vmul.f32 %v285, %v291
      %v294 = vld [vmem:[%s2] sm:$0x1]
      %v296 = vlaneseq
      %v297 = vshrl.u32 %v296, 7
      %v298 = vsub.s32 0, %v297
      %v299 = vrot.slane %v294, %v298
      %v301 = vadd.f32 %v293, %v299
      %v302 = vpack.c.bf16 %v301, %v301
      %v303 = vld [vmem:[%s3] sm:$0xff]
      %v304 = vld [vmem:[%s3 + $0x8] sm:$0xff]
      %v305 = vld [vmem:[%s3 + $0x10] sm:$0xff]
      %v306 = vld [vmem:[%s3 + $0x18] sm:$0xff]
      %v307 = vld [vmem:[%s3 + $0x20] sm:$0xff]
      %v308 = vld [vmem:[%s3 + $0x28] sm:$0xff]
      %v309 = vld [vmem:[%s3 + $0x30] sm:$0xff]
      %v310 = vld [vmem:[%s3 + $0x38] sm:$0xff]
      %v311 = vld [vmem:[%s3 + $0x40] sm:$0xff]
      %v312 = vld [vmem:[%s3 + $0x48] sm:$0xff]
      %v313 = vld [vmem:[%s3 + $0x50] sm:$0xff]
      %v314 = vld [vmem:[%s3 + $0x58] sm:$0xff]
      %v315 = vld [vmem:[%s3 + $0x60] sm:$0xff]
      %v316 = vld [vmem:[%s3 + $0x68] sm:$0xff]
      %v317 = vld [vmem:[%s3 + $0x70] sm:$0xff]
      %v318 = vld [vmem:[%s3 + $0x78] sm:$0xff]
      %v335 = vunpack.c.l.b16 %v303
      %v336 = vunpack.c.h.b16 %v303
      %v337 = vunpack.c.l.b16 %v304
      %v338 = vunpack.c.h.b16 %v304
      %v339 = vunpack.c.l.b16 %v305
      %v340 = vunpack.c.h.b16 %v305
      %v341 = vunpack.c.l.b16 %v306
      %v342 = vunpack.c.h.b16 %v306
      %v343 = vunpack.c.l.b16 %v307
      %v344 = vunpack.c.h.b16 %v307
      %v345 = vunpack.c.l.b16 %v308
      %v346 = vunpack.c.h.b16 %v308
      %v347 = vunpack.c.l.b16 %v309
      %v348 = vunpack.c.h.b16 %v309
      %v349 = vunpack.c.l.b16 %v310
      %v350 = vunpack.c.h.b16 %v310
      %v351 = vunpack.c.l.b16 %v311
      %v352 = vunpack.c.h.b16 %v311
      %v353 = vunpack.c.l.b16 %v312
      %v354 = vunpack.c.h.b16 %v312
      %v355 = vunpack.c.l.b16 %v313
      %v356 = vunpack.c.h.b16 %v313
      %v357 = vunpack.c.l.b16 %v314
      %v358 = vunpack.c.h.b16 %v314
      %v359 = vunpack.c.l.b16 %v315
      %v360 = vunpack.c.h.b16 %v315
      %v361 = vunpack.c.l.b16 %v316
      %v362 = vunpack.c.h.b16 %v316
      %v363 = vunpack.c.l.b16 %v317
      %v364 = vunpack.c.h.b16 %v317
      %v365 = vunpack.c.l.b16 %v318
      %v366 = vunpack.c.h.b16 %v318
      %v367 = vpack.c.b16 %v337, %v335
      %v368 = vpack.c.b16 %v338, %v336
      %v369 = vpack.c.b16 %v341, %v339
      %v370 = vpack.c.b16 %v342, %v340
      %v371 = vpack.c.b16 %v345, %v343
      %v372 = vpack.c.b16 %v346, %v344
      %v373 = vpack.c.b16 %v349, %v347
      %v374 = vpack.c.b16 %v350, %v348
      %v375 = vpack.c.b16 %v353, %v351
      %v376 = vpack.c.b16 %v354, %v352
      %v377 = vpack.c.b16 %v357, %v355
      %v378 = vpack.c.b16 %v358, %v356
      %v379 = vpack.c.b16 %v361, %v359
      %v380 = vpack.c.b16 %v362, %v360
      %v381 = vpack.c.b16 %v365, %v363
      %v382 = vpack.c.b16 %v366, %v364
      %399 = vmatprep.subr.bf16.mxu0 %v368
      %400 = vmatpush1.bf16.msra.mxu0 %v367
      %401 = vmatprep.subr.bf16.mxu0 %v370
      %402 = vmatpush1.bf16.msra.mxu0 %v369
      %403 = vmatprep.subr.bf16.mxu0 %v372
      %404 = vmatpush1.bf16.msra.mxu0 %v371
      %405 = vmatprep.subr.bf16.mxu0 %v374
      %406 = vmatpush1.bf16.msra.mxu0 %v373
      %407 = vmatprep.subr.bf16.mxu0 %v376
      %408 = vmatpush1.bf16.msra.mxu0 %v375
      %409 = vmatprep.subr.bf16.mxu0 %v378
      %410 = vmatpush1.bf16.msra.mxu0 %v377
      %411 = vmatprep.subr.bf16.mxu0 %v380
      %412 = vmatpush1.bf16.msra.mxu0 %v379
      %413 = vmatprep.subr.bf16.mxu0 %v382
      %414 = vmatpush1.bf16.msra.mxu0 %v381
      %415 = vmatprep.subr.bf16.mxu0 0
      %416 = vmatpush1.bf16.msra.mxu0 0
      %417 = vmatprep.subr.bf16.mxu0 0
      %418 = vmatpush1.bf16.msra.mxu0 0
      %419 = vmatprep.subr.bf16.mxu0 0
      %420 = vmatpush1.bf16.msra.mxu0 0
      %421 = vmatprep.subr.bf16.mxu0 0
      %422 = vmatpush1.bf16.msra.mxu0 0
      %423 = vmatprep.subr.bf16.mxu0 0
      %424 = vmatpush1.bf16.msra.mxu0 0
      %425 = vmatprep.subr.bf16.mxu0 0
      %426 = vmatpush1.bf16.msra.mxu0 0
      %427 = vmatprep.subr.bf16.mxu0 0
      %428 = vmatpush1.bf16.msra.mxu0 0
      %429 = vmatprep.subr.bf16.mxu0 0
      %430 = vmatpush1.bf16.msra.mxu0 0
      %431 = vmatprep.mubr.bf16.mxu0 0
      %432 = vmatmul.mubr.bf16.gmra.mrb[0].mxu0 %v302
      %v433 = vpop.f32.mrb[0].mxu0
      %v434 = vadd.f32 0.0, %v433
      %v435 = vpop.f32.mrb[0].mxu0
      %v436 = vadd.f32 0.0, %v435
      %v437 = vpop.f32.mrb[0].mxu0
      %v438 = vpop.f32.mrb[0].mxu0
      %439 = vdwg.mxu0
      %v440 = vmax.f32 %v436, 0.0
      %v441 = vand.u32 2147483647, %v436
      %v442 = vsub.f32 0.0, %v441
      %v443 = vmul.f32 %v442, 1.442695
      %v444 = vpow.pop %v443
      %v445 = vadd.f32 %v444, 1.0
      %v446 = vlog2.pop %v445
      %v447 = vmul.f32 %v446, 0.6931472
      %v448 = vadd.f32 %v440, %v447
      %v449 = vsub.f32 0.0, %v448
      %v450 = vsub.f32 %v436, %v448
      %vm451 = vcmp.ge.f32.partialorder %v434, 0.0
      %v452 = vmax.f32 %v434, 0.0
      %v453 = vadd.f32 %v452, 0.5
      %v454 = vlog2.pop %v453
      %v455 = vmul.f32 %v454, 0.6931472
      %v456 = vsub.f32 0.0, %v434
      %v457 = vmax.f32 %v456, 0.0
      %v458 = vand.u32 2147483647, %v456
      %v459 = vsub.f32 0.0, %v458
      %v460 = vmul.f32 %v459, 1.442695
      %v461 = vpow.pop %v460
      %v462 = vadd.f32 %v461, 1.0
      %v463 = vlog2.pop %v462
      %v464 = vmul.f32 %v463, 0.6931472
      %v465 = vadd.f32 %v457, %v464
      %v466 = vsub.f32 0.0, %v465
      %v467 = vsel %vm451, %v455, %v466
      %v468 = vadd.f32 %v450, %v467
      %v469 = vlaneseq
      %v470 = vshrl.u32 %v469, 7
      %vm471 = vcmp.le.s32.totalorder %v272, %v470
      %v472 = vsel %vm471, 1, 0
      %v473 = vcvt.s32.f32 %v472
      %vm474 = vcmask 64512
      %v476 = vsel %vm474, %v473, 0
      %478 = vmatprep.subr.mxu0 0.0
      %479 = vmatpush1.msra.mxu0 %v449
      %480 = vmatprep.subr.mxu0 0.0
      %481 = vmatpush1.msra.mxu0 0.0
      %482 = vmatprep.subr.mxu0 0.0
      %483 = vmatpush1.msra.mxu0 0.0
      %484 = vmatprep.subr.mxu0 0.0
      %485 = vmatpush1.msra.mxu0 0.0
      %486 = vmatprep.subr.mxu0 0.0
      %487 = vmatpush1.msra.mxu0 0.0
      %488 = vmatprep.subr.mxu0 0.0
      %489 = vmatpush1.msra.mxu0 0.0
      %490 = vmatprep.subr.mxu0 0.0
      %491 = vmatpush1.msra.mxu0 0.0
      %492 = vmatprep.subr.mxu0 0.0
      %493 = vmatpush1.msra.mxu0 0.0
      %494 = vmatprep.subr.mxu0 0.0
      %495 = vmatpush1.msra.mxu0 0.0
      %496 = vmatprep.subr.mxu0 0.0
      %497 = vmatpush1.msra.mxu0 0.0
      %498 = vmatprep.subr.mxu0 0.0
      %499 = vmatpush1.msra.mxu0 0.0
      %500 = vmatprep.subr.mxu0 0.0
      %501 = vmatpush1.msra.mxu0 0.0
      %502 = vmatprep.subr.mxu0 0.0
      %503 = vmatpush1.msra.mxu0 0.0
      %504 = vmatprep.subr.mxu0 0.0
      %505 = vmatpush1.msra.mxu0 0.0
      %506 = vmatprep.subr.mxu0 0.0
      %507 = vmatpush1.msra.mxu0 0.0
      %508 = vmatprep.subr.mxu0 0.0
      %509 = vmatpush1.msra.mxu0 0.0
      %510 = vmatprep.subr.mxu0 0.0
      %511 = vmatpush1.msra.mxu0 0.0
      %512 = vmatprep.subr.mxu0 0.0
      %513 = vmatpush1.msra.mxu0 0.0
      %514 = vmatprep.subr.mxu0 0.0
      %515 = vmatpush1.msra.mxu0 0.0
      %516 = vmatprep.subr.mxu0 0.0
      %517 = vmatpush1.msra.mxu0 0.0
      %518 = vmatprep.subr.mxu0 0.0
      %519 = vmatpush1.msra.mxu0 0.0
      %520 = vmatprep.subr.mxu0 0.0
      %521 = vmatpush1.msra.mxu0 0.0
      %522 = vmatprep.subr.mxu0 0.0
      %523 = vmatpush1.msra.mxu0 0.0
      %524 = vmatprep.subr.mxu0 0.0
      %525 = vmatpush1.msra.mxu0 0.0
      %526 = vmatprep.subr.mxu0 0.0
      %527 = vmatpush1.msra.mxu0 0.0
      %528 = vmatprep.subr.mxu0 0.0
      %529 = vmatpush1.msra.mxu0 0.0
      %530 = vmatprep.subr.mxu0 0.0
      %531 = vmatpush1.msra.mxu0 0.0
      %532 = vmatprep.subr.mxu0 0.0
      %533 = vmatpush1.msra.mxu0 0.0
      %534 = vmatprep.subr.mxu0 0.0
      %535 = vmatpush1.msra.mxu0 0.0
      %536 = vmatprep.subr.mxu0 0.0
      %537 = vmatpush1.msra.mxu0 0.0
      %538 = vmatprep.subr.mxu0 0.0
      %539 = vmatpush1.msra.mxu0 0.0
      %540 = vmatprep.subr.mxu0 0.0
      %541 = vmatpush1.msra.mxu0 0.0
      %542 = vmatprep.mubr.f32.mxu0 0.0
      %543 = vmatmul.mubr.f32.gmra.mrb[0].mxu0 %v476
      %v544 = vpop.f32.mrb[0].mxu0
      %v545 = vadd.f32 0.0, %v544
      %v546 = vpop.f32.mrb[0].mxu0
      %547 = vdwg.mxu0
      %v548 = vld [vmem:[#allocation2] sm:$0x1]
      %v550 = vlaneseq
      %v551 = vshrl.u32 %v550, 7
      %v552 = vsub.s32 0, %v551
      %v553 = vrot.slane %v548, %v552
      %v555 = vadd.f32 %v553, %v545
      %v556 = vsub.f32 %v468, %v555
      %v557 = vld [vmem:[#allocation3] sm:$0x1]
      %v558 = vrot.slane %v556, 4
      %v559 = vmax.f32 %v556, %v558
      %v560 = vrot.slane %v559, 2
      %v561 = vmax.f32 %v559, %v560
      %v562 = vrot.slane %v561, 1
      %v563 = vmax.f32 %v561, %v562
      %v564 = vmax.f32 %v557, %v563
      %v566 = vlaneseq
      %v567 = vshrl.u32 %v566, 7
      %v568 = vsub.s32 0, %v567
      %v569 = vrot.slane %v564, %v568
      %v571 = vsub.f32 %v556, %v569
      %v572 = vmul.f32 %v571, 1.442695
      %v573 = vpow.pop %v572
      %v574 = vsub.f32 %v557, %v564
      %v575 = vmul.f32 %v574, 1.442695
      %v576 = vpow.pop %v575
      %v577 = vld [vmem:[#allocation4] sm:$0x1]
      %v578 = vmul.f32 %v576, %v577
      %v580 = vlaneseq
      %v581 = vshrl.u32 %v580, 7
      %v582 = vsub.s32 0, %v581
      %v583 = vrot.slane %v578, %v582
      %585 = vmatprep.subr.mxu0 0.0
      %586 = vmatpush1.msra.mxu0 %v573
      %587 = vmatprep.subr.mxu0 0.0
      %588 = vmatpush1.msra.mxu0 0.0
      %589 = vmatprep.subr.mxu0 0.0
      %590 = vmatpush1.msra.mxu0 0.0
      %591 = vmatprep.subr.mxu0 0.0
      %592 = vmatpush1.msra.mxu0 0.0
      %593 = vmatprep.subr.mxu0 0.0
      %594 = vmatpush1.msra.mxu0 0.0
      %595 = vmatprep.subr.mxu0 0.0
      %596 = vmatpush1.msra.mxu0 0.0
      %597 = vmatprep.subr.mxu0 0.0
      %598 = vmatpush1.msra.mxu0 0.0
      %599 = vmatprep.subr.mxu0 0.0
      %600 = vmatpush1.msra.mxu0 0.0
      %601 = vmatprep.subr.mxu0 0.0
      %602 = vmatpush1.msra.mxu0 0.0
      %603 = vmatprep.subr.mxu0 0.0
      %604 = vmatpush1.msra.mxu0 0.0
      %605 = vmatprep.subr.mxu0 0.0
      %606 = vmatpush1.msra.mxu0 0.0
      %607 = vmatprep.subr.mxu0 0.0
      %608 = vmatpush1.msra.mxu0 0.0
      %609 = vmatprep.subr.mxu0 0.0
      %610 = vmatpush1.msra.mxu0 0.0
      %611 = vmatprep.subr.mxu0 0.0
      %612 = vmatpush1.msra.mxu0 0.0
      %613 = vmatprep.subr.mxu0 0.0
      %614 = vmatpush1.msra.mxu0 0.0
      %615 = vmatprep.subr.mxu0 0.0
      %616 = vmatpush1.msra.mxu0 0.0
      %617 = vmatprep.subr.mxu0 0.0
      %618 = vmatpush1.msra.mxu0 0.0
      %619 = vmatprep.subr.mxu0 0.0
      %620 = vmatpush1.msra.mxu0 0.0
      %621 = vmatprep.subr.mxu0 0.0
      %622 = vmatpush1.msra.mxu0 0.0
      %623 = vmatprep.subr.mxu0 0.0
      %624 = vmatpush1.msra.mxu0 0.0
      %625 = vmatprep.subr.mxu0 0.0
      %626 = vmatpush1.msra.mxu0 0.0
      %627 = vmatprep.subr.mxu0 0.0
      %628 = vmatpush1.msra.mxu0 0.0
      %629 = vmatprep.subr.mxu0 0.0
      %630 = vmatpush1.msra.mxu0 0.0
      %631 = vmatprep.subr.mxu0 0.0
      %632 = vmatpush1.msra.mxu0 0.0
      %633 = vmatprep.subr.mxu0 0.0
      %634 = vmatpush1.msra.mxu0 0.0
      %635 = vmatprep.subr.mxu0 0.0
      %636 = vmatpush1.msra.mxu0 0.0
      %637 = vmatprep.subr.mxu0 0.0
      %638 = vmatpush1.msra.mxu0 0.0
      %639 = vmatprep.subr.mxu0 0.0
      %640 = vmatpush1.msra.mxu0 0.0
      %641 = vmatprep.subr.mxu0 0.0
      %642 = vmatpush1.msra.mxu0 0.0
      %643 = vmatprep.subr.mxu0 0.0
      %644 = vmatpush1.msra.mxu0 0.0
      %645 = vmatprep.subr.mxu0 0.0
      %646 = vmatpush1.msra.mxu0 0.0
      %647 = vmatprep.subr.mxu0 0.0
      %648 = vmatpush1.msra.mxu0 0.0
      %649 = vmatprep.mubr.f32.mxu0 0.0
      %650 = vmatmul.mubr.f32.gmra.mrb[0].mxu0 %v476
      %v651 = vpop.f32.mrb[0].mxu0
      %v652 = vadd.f32 %v583, %v651
      %v653 = vpop.f32.mrb[0].mxu0
      %654 = vdwg.mxu0
      %v655 = vadd.f32 %v555, %v569
      %v656 = vmax.f32 %v652, 1e-37
      %v657 = vlog2.pop %v656
      %v658 = vmul.f32 %v657, 0.6931472
      %v659 = vadd.f32 %v655, %v658
      %v660 = vmul.f32 %v659, 1.442695
      %v661 = vpow.pop %v660
      %662 = vst [vmem:[%s257] sm:$0xff] %v661
      %663 = vst [vmem:[#allocation2 - $0x7] sm:$0x80] %v555
      %664 = vst [vmem:[#allocation4 - $0x7] sm:$0x80] %v652
      %665 = vst [vmem:[#allocation3] sm:$0x1] %v564
      %v666 = vsel %vm273, %v661, 3e+38
      %667 = vmin.xlane.f32.xlu0 %v666
      %v668 = vpop.xlane.xlu0 %667
      %v669 = vrot.slane %v668, 4
      %v670 = vmin.f32 %v668, %v669
      %v671 = vrot.slane %v670, 2
      %v672 = vmin.f32 %v670, %v671
      %v673 = vrot.slane %v672, 1
      %v674 = vmin.f32 %v672, %v673
      %s675 = vtos %v674
      %v676 = vsel %vm273, %v661, -3e+38
      %677 = vmax.xlane.f32.xlu0 %v676
      %v678 = vpop.xlane.xlu0 %677
      %v679 = vrot.slane %v678, 4
      %v680 = vmax.f32 %v678, %v679
      %v681 = vrot.slane %v680, 2
      %v682 = vmax.f32 %v680, %v681
      %v683 = vrot.slane %v682, 1
      %v684 = vmax.f32 %v682, %v683
      %s685 = vtos %v684
      %vm686 = vcmp.eq.s32.totalorder %v470, 0
      %v687 = vstv %s675
      %v688 = vstv %s685
      %v689 = vsel %vm686, %v687, %v688
      // Predicated region
      $region41: #{_forward_impl.2} parent=35 // pred_check
        %p690 = pneg %p263
      $region42: #{_forward_impl.2} parent=35 // pred_check_branch
        %692 = sbr.rel (%p690) target = $region44
      $region43: #{_forward_impl.2} parent=35 // pred_region
        %693 = vst [vmem:[%s261] sm:$0x3] %v689
      $region44: #{_forward_impl.2} parent=35 // pred_fallthru
        _
      %p694 = scmp.gt.s32.totalorder %s22, 0
      // Predicated region
      $region45: #{_forward_impl.2} parent=35 // pred_check
        %p695 = pneg %p694
      $region46: #{_forward_impl.2} parent=35 // pred_check_branch
        %697 = sbr.rel (%p695) target = $region48
      $region47: #{_forward_impl.2} parent=35 // pred_region
        %v698 = vld [vmem:[%s261] sm:$0x3]
        %v699 = vmin.f32 %v698, %v689
        %v700 = vmax.f32 %v698, %v689
        %v701 = vsel %vm686, %v699, %v700
        %702 = vst [vmem:[%s261] sm:$0x3] %v701
      $region48: #{_forward_impl.2} parent=35 // pred_fallthru
        _
      %p703 = scmp.lt.s32.totalorder %s21, 1
      %s704 = scalar_select %p703, %s21, 1
      %p705 = scmp.lt.s32.totalorder %s22, 0
      %s706 = scalar_select %p705, %s22, 0
      %s707 = sadd.s32 %s706, %s704
      %s708 = smul.addr %s707, 8
      %s709 = scalar_lea.vmem %s4, %s708
      %p710 = scmp.lt.s32.totalorder %s21, 1
      %s711 = scalar_select %p710, %s21, 1
      %s712 = smul.addr %s711, 2
      %s713 = scalar_lea.vmem %s5, %s712
      // Predicated region
      $region49: #{_forward_impl.2} parent=35 // pred_check
        %p714 = pneg %p140
      $region50: #{_forward_impl.2} parent=35 // pred_check_branch
        %716 = sbr.rel (%p714) target = $region52
      $region51: #{_forward_impl.2} parent=35 // pred_region
        _
      $region52: #{_forward_impl.2} parent=35 // pred_fallthru
        _
      // Predicated region
      $region53: #{_forward_impl.2} parent=35 // pred_check
        %p717 = pneg %p166
      $region54: #{_forward_impl.2} parent=35 // pred_check_branch
        %719 = sbr.rel (%p717) target = $region56
      $region55: #{_forward_impl.2} parent=35 // pred_region
        _
      $region56: #{_forward_impl.2} parent=35 // pred_fallthru
        _
    $region36: #{_forward_impl.2} parent=5 // pred_fallthru
      _
    %p720 = scmp.le.s32.totalorder 2, %s12
    // Predicated region
    $region57: #{_forward_impl.2} parent=5 // pred_check
      %p721 = pneg %p720
    $region58: #{_forward_impl.2} parent=5 // pred_check_branch
      %723 = sbr.rel (%p721) target = $region60
    $region59: #{_forward_impl.2} parent=5 // pred_region
      %s724 = ssub.s32 %s12, 2
      // Predicated region
      $region61: #{_forward_impl.2} parent=59 // pred_check
        %p725 = pneg %p146
      $region62: #{_forward_impl.2} parent=59 // pred_check_branch
        %727 = sbr.rel (%p725) target = $region64
      $region63: #{_forward_impl.2} parent=59 // pred_region
        %p728 = scmp.lt.s32.totalorder %s23, 1
        %s729 = scalar_select %p728, %s23, 1
        %p730 = scmp.lt.s32.totalorder %s24, 0
        %s731 = scalar_select %p730, %s24, 0
        %s732 = sadd.s32 %s731, %s729
        %s733 = smul.addr %s732, 8
        %s734 = scalar_lea.vmem %s4, %s733
      $region64: #{_forward_impl.2} parent=59 // pred_fallthru
        _
      // Predicated region
      $region65: #{_forward_impl.2} parent=59 // pred_check
        %p735 = pneg %p172
      $region66: #{_forward_impl.2} parent=59 // pred_check_branch
        %737 = sbr.rel (%p735) target = $region68
      $region67: #{_forward_impl.2} parent=59 // pred_region
        %p738 = scmp.lt.s32.totalorder %s23, 1
        %s739 = scalar_select %p738, %s23, 1
        %s740 = smul.addr %s739, 2
        %s741 = scalar_lea.vmem %s5, %s740
      $region68: #{_forward_impl.2} parent=59 // pred_fallthru
        _
    $region60: #{_forward_impl.2} parent=5 // pred_fallthru
      _
  $region6: #{_forward_impl.2} parent=0 // loop_footer
    %s16 = sadd.s32 1, %s12
  $region7: #{_forward_impl.2} parent=0 // loop_footer_branch
    %11 = sbr.rel target = $region3
  $region8: #{_forward_impl.2} parent=0 // loop_exit
    _

</llo_original>
